<compile_context>
chip_gen: v5e
topology: v5e:2x2
jax: 0.10.0
libtpu: 0.0.40
codegen_flags: <defaults>
</compile_context>

<pallas_src>
import functools

import jax
import jax.numpy as jnp
from jax.experimental import pallas as pl
from jax.experimental.pallas import tpu as pltpu

IN_FEATURES = 196608   # = 64 * 3 * 32 * 32 (CIFAR10 batch flattened, as in the module)
OUT_FEATURES = 10
TK = 32768             # K-tile: 196608 / (2 cores * 32768) = 3 steps per core
N_SPLITS = 2           # K-shards (maps to the 2 TensorCores on v7x; harmless elsewhere)


def _gemv_kernel(x_ref, w_ref, o_ref, acc_ref):
    """One K-tile of this core's partial y = sum_k w[:, k] * x[k].

    x_ref:   (1, TK)       flattened-input tile (lane-dense)
    w_ref:   (10, TK)      native-layout weight tile (lane-dense, no transpose)
    o_ref:   (1, 10, 1)    per-core partial output (written at the last K step)
    acc_ref: (10, 1) f32   VMEM accumulator, resident across the K axis
    """
    k = pl.program_id(1)

    @pl.when(k == 0)
    def _():
        acc_ref[...] = jnp.zeros_like(acc_ref)

    # VPU multiply with sublane broadcast of x, then lane reduce -> (10, 1).
    prod = w_ref[...] * x_ref[...]
    acc_ref[...] += jnp.sum(prod, axis=-1, keepdims=True)

    @pl.when(k == pl.num_programs(1) - 1)
    def _():
        o_ref[0] = acc_ref[...]


@functools.partial(jax.jit, static_argnames=("tk",))
def yinkang_forward(x, weight, bias, *, tk=TK):
    """Equivalent of YinKang.forward: torch.flatten(x) -> Linear(196608, 10).

    x:      any shape with 196608 total elements (e.g. (64, 3, 32, 32)), float32
    weight: (10, 196608) float32   (native PyTorch Linear layout, NOT transposed)
    bias:   (10,) float32
    returns (10,) float32
    """
    out_f, k_total = weight.shape
    assert k_total % (N_SPLITS * tk) == 0, "K must divide evenly into shards*tiles"
    nk = k_total // (N_SPLITS * tk)       # K-steps per shard

    x_flat = x.reshape(1, k_total)        # glue: flatten in plain JAX (row-major, == torch.flatten)

    partial = pl.pallas_call(
        _gemv_kernel,
        out_shape=jax.ShapeDtypeStruct((N_SPLITS, out_f, 1), jnp.float32),
        grid_spec=pltpu.PrefetchScalarGridSpec(
            num_scalar_prefetch=0,
            grid=(N_SPLITS, nk),
            in_specs=[
                # x tile: (1, tk), lane-dense
                pl.BlockSpec((1, tk), lambda c, k: (0, c * nk + k)),
                # weight tile: (10, tk), native layout, lane-dense
                pl.BlockSpec((out_f, tk), lambda c, k: (0, c * nk + k)),
            ],
            # one (10, 1) partial column per shard; constant block across K -> resident
            out_specs=pl.BlockSpec((1, out_f, 1), lambda c, k: (c, 0, 0)),
            scratch_shapes=[pltpu.VMEM((out_f, 1), jnp.float32)],
        ),
        compiler_params=pltpu.CompilerParams(
            dimension_semantics=("parallel", "arbitrary"),   # shard K across TCs; K-tiles are a reduction
        ),
    )(x_flat, weight)

    # Combine the per-shard partials and add the bias exactly once (tiny epilogue).
    return partial[:, :, 0].sum(axis=0) + bias


if __name__ == "__main__":
    key = jax.random.PRNGKey(0)
    k_x, k_w, k_b = jax.random.split(key, 3)

    # Input consistent with the module: 64x3x32x32 == 196608 elements (NCHW).
    x = jax.random.normal(k_x, (64, 3, 32, 32), dtype=jnp.float32)

    # Deterministic parameter init (PyTorch Linear default: U(-1/sqrt(K), 1/sqrt(K))).
    bound = 1.0 / (IN_FEATURES ** 0.5)
    weight = jax.random.uniform(
        k_w, (OUT_FEATURES, IN_FEATURES), dtype=jnp.float32, minval=-bound, maxval=bound
    )
    bias = jax.random.uniform(
        k_b, (OUT_FEATURES,), dtype=jnp.float32, minval=-bound, maxval=bound
    )

    y = yinkang_forward(x, weight, bias)
    y = jax.block_until_ready(y)

    # Pure-JAX reference check of the hot path.
    y_ref = weight @ x.reshape(-1) + bias
    assert y.shape == (OUT_FEATURES,)
    assert jnp.allclose(y, y_ref, atol=1e-3, rtol=1e-3)

    print("KERNEL_OK")
</pallas_src>

<mosaic_0001>
module attributes {stable_mosaic.version = 11 : i64} {
  func.func @_gemv_kernel(%arg0: i32, %arg1: i32, %arg2: memref<1x32768xf32, #tpu.memory_space<vmem>>, %arg3: memref<10x32768xf32, #tpu.memory_space<vmem>>, %arg4: memref<1x10x1xf32, #tpu.memory_space<vmem>>, %arg5: memref<10x1xf32, #tpu.memory_space<vmem>>) attributes {dimension_semantics = [#tpu.dimension_semantics<parallel>, #tpu.dimension_semantics<arbitrary>], iteration_bounds = array<i64: 2, 3>, scalar_prefetch = 0 : i64, scratch_operands = 1 : i64, tpu.core_type = #tpu.core_type<tc>, window_params = [{transform_indices = @transform_0, window_bounds = array<i64: 1, 32768>}, {transform_indices = @transform_1, window_bounds = array<i64: 10, 32768>}, {transform_indices = @transform_2, window_bounds = array<i64: 1, 10, 1>}]} {
    %c0_i32 = arith.constant 0 : i32
    %0 = arith.cmpi eq, %arg1, %c0_i32 : i32
    %1 = arith.extui %0 : i1 to i32
    %c0_i32_0 = arith.constant 0 : i32
    %2 = arith.cmpi ne, %1, %c0_i32_0 : i32
    scf.if %2 {
      %cst_9 = arith.constant 0.000000e+00 : f32
      %15 = vector.broadcast %cst_9 : f32 to vector<10x1xf32>
      %c0_10 = arith.constant 0 : index
      %c0_11 = arith.constant 0 : index
      %16 = vector.load %arg5[%c0_10, %c0_11] : memref<10x1xf32, #tpu.memory_space<vmem>>, vector<10x1xf32>
      tpu.vector_store %arg5[%c0_10, %c0_11], %15 {strides = array<i32>} : memref<10x1xf32, #tpu.memory_space<vmem>>, vector<10x1xf32>,
    } else {
    }
    %c0 = arith.constant 0 : index
    %c0_1 = arith.constant 0 : index
    %3 = vector.load %arg3[%c0, %c0_1] : memref<10x32768xf32, #tpu.memory_space<vmem>>, vector<10x32768xf32>
    %c0_2 = arith.constant 0 : index
    %c0_3 = arith.constant 0 : index
    %4 = vector.load %arg2[%c0_2, %c0_3] : memref<1x32768xf32, #tpu.memory_space<vmem>>, vector<1x32768xf32>
    %5 = vector.broadcast %4 : vector<1x32768xf32> to vector<10x32768xf32>
    %6 = arith.mulf %3, %5 : vector<10x32768xf32>
    %c0_4 = arith.constant 0 : index
    %c0_5 = arith.constant 0 : index
    %7 = vector.load %arg5[%c0_4, %c0_5] : memref<10x1xf32, #tpu.memory_space<vmem>>, vector<10x1xf32>
    %cst = arith.constant dense<0.000000e+00> : vector<10xf32>
    %8 = vector.multi_reduction <add>, %6, %cst [1] : vector<10x32768xf32> to vector<10xf32>
    %9 = vector.shape_cast %8 : vector<10xf32> to vector<10x1xf32>
    %10 = arith.addf %7, %9 : vector<10x1xf32>
    %c0_6 = arith.constant 0 : index
    %c0_7 = arith.constant 0 : index
    %11 = vector.load %arg5[%c0_6, %c0_7] : memref<10x1xf32, #tpu.memory_space<vmem>>, vector<10x1xf32>
    tpu.vector_store %arg5[%c0_6, %c0_7], %10 {strides = array<i32>} : memref<10x1xf32, #tpu.memory_space<vmem>>, vector<10x1xf32>,
    %c2_i32 = arith.constant 2 : i32
    %12 = arith.cmpi eq, %arg1, %c2_i32 : i32
    %13 = arith.extui %12 : i1 to i32
    %c0_i32_8 = arith.constant 0 : i32
    %14 = arith.cmpi ne, %13, %c0_i32_8 : i32
    scf.if %14 {
      %c0_9 = arith.constant 0 : index
      %c0_10 = arith.constant 0 : index
      %15 = vector.load %arg5[%c0_9, %c0_10] : memref<10x1xf32, #tpu.memory_space<vmem>>, vector<10x1xf32>
      %c0_11 = arith.constant 0 : index
      %c0_12 = arith.constant 0 : index
      %c0_13 = arith.constant 0 : index
      %16 = vector.load %arg4[%c0_11, %c0_12, %c0_13] : memref<1x10x1xf32, #tpu.memory_space<vmem>>, vector<1x10x1xf32>
      %17 = vector.shape_cast %16 : vector<1x10x1xf32> to vector<10x1xf32>
      %18 = vector.shape_cast %15 : vector<10x1xf32> to vector<1x10x1xf32>
      tpu.vector_store %arg4[%c0_11, %c0_12, %c0_13], %18 {strides = array<i32>} : memref<1x10x1xf32, #tpu.memory_space<vmem>>, vector<1x10x1xf32>,
    } else {
    }
    return
  }
  func.func @transform_0(%arg0: i32, %arg1: i32) -> (i32, i32) {
    %c3_i32 = arith.constant 3 : i32
    %0 = arith.muli %arg0, %c3_i32 : i32
    %1 = arith.addi %0, %arg1 : i32
    %c0_i32 = arith.constant 0 : i32
    %c0_i32_0 = arith.constant 0 : i32
    return %c0_i32, %1 : i32, i32
  }
  func.func @transform_1(%arg0: i32, %arg1: i32) -> (i32, i32) {
    %c3_i32 = arith.constant 3 : i32
    %0 = arith.muli %arg0, %c3_i32 : i32
    %1 = arith.addi %0, %arg1 : i32
    %c0_i32 = arith.constant 0 : i32
    %c0_i32_0 = arith.constant 0 : i32
    return %c0_i32, %1 : i32, i32
  }
  func.func @transform_2(%arg0: i32, %arg1: i32) -> (i32, i32, i32) {
    %c0_i32 = arith.constant 0 : i32
    %c0_i32_0 = arith.constant 0 : i32
    %c0_i32_1 = arith.constant 0 : i32
    return %arg0, %c0_i32, %c0_i32_0 : i32, i32, i32
  }
}

</mosaic_0001>

<llo_original>
// kernel: yinkang_forward.1
$region0: #{yinkang_forward.1}
  #allocation0 [shape = 'u32[]', space=smem, size = 0x4, offset = 0x4, fixed_abs, tag = 'smem constant byte address 0x4 - core index']
  #allocation1 [shape = 'u32[72,128]{1,0:T(1,128)}', space=vmem, size = 0x9000, scoped, tag = 'internal scratch']
  #allocation2 [shape = 'f32[10,1]{1,0:T(8,128)}', space=vmem, size = 0x2000, scoped, tag = 'scratch operand']
  %s0 = inlined_call_operand.vmem [shape: f32[1,196608], index: 0, kind: input, shape index: {}]
  %s1 = inlined_call_operand.hbm [shape: f32[10,196608], index: 1, kind: input, shape index: {}]
  %s2 = inlined_call_operand.vmem [shape: f32[2,10,1], index: 2, kind: output, shape index: {}]
  %s3 = sld [smem:[#allocation0]]
  $region53: #{yinkang_forward.1} parent=0
    _
  %s5 = ssub.s32 1, %s3
  %s6 = scalar_select 0, %s5, %s3
  $region1: #{yinkang_forward.1} parent=0
    #allocation3 [shape = 'u8[4194304]{0}', space=vmem, size = 0x400000, scoped, tag = 'input window, operand 1']
    #allocation4 [shape = 's32[2]{0}', space=sflag, size = 0x8, scoped, tag = 'scoped memory for yinkang_forward.1']
    %7 = vsyncpa [#allocation4], 0
    %s8 = scalar_lea.sflag [#allocation4], 1
    %9 = vsyncpa %s8, 0
    loop: start=0, step=1, limit=8
    $region2: #{yinkang_forward.1} parent=1 // loop_pre_header
      _
    $region3: #{yinkang_forward.1} parent=1 // loop_header
      %s11 = sphi 0, %s15
      %p12 = scmp.ge.s32.totalorder %s11, 8
      %s18 = sphi 0, %s30
      %s19 = sphi 0, %s26
      %s20 = sphi 0, %s18
      %s21 = sphi 0, %s19
      %s22 = sphi 0, %s20
      %s23 = sphi 0, %s21
      %s37 = sphi 0, %s39
      %s40 = sphi 0, %s37
      %s41 = sphi 0, %s40
      %s57 = sphi 0, %s41
      %s67 = sphi 0, %s69
      %s70 = sphi 0, %s67
      %s71 = sphi 0, %s70
      %s87 = sphi 0, %s71
      %s93 = sphi 0, %s95
      %s96 = sphi 0, %s93
      %s97 = sphi 0, %s96
      %s113 = sphi 0, %s97
    $region4: #{yinkang_forward.1} parent=1 // loop_header_branch
      %14 = sbr.rel (%p12) target = $region8
    $region5: #{yinkang_forward.1} parent=1 // loop_body
      %s16 = ssub.s32 %s11, 1
      %s17 = ssub.s32 %s11, 2
      %s24 = sadd.s32 1, %s19
      %p25 = scmp.ge.s32.totalorder %s24, 3
      %s26 = scalar_select %p25, 0, %s24
      %s27 = sadd.s32 1, %s18
      %s28 = scalar_select %p25, %s27, %s18
      %p29 = scmp.ge.s32.totalorder %s28, 2
      %s30 = scalar_select %p29, 0, %s28
      %s31 = smul.u32 %s18, 3
      %s32 = sadd.s32 %s31, %s19
      %s33 = smul.u32 %s30, 3
      %s34 = sadd.s32 %s33, %s26
      %s35 = ssub.s32 %s32, %s34
      %p36 = scmp.eq.s32.totalorder %s35, 0
      %s38 = sadd.s32 %s37, 1
      %s39 = scalar_select %p36, %s37, %s38
      %p42 = pneg %p36
      %p43 = scmp.eq.s32.totalorder %s11, 5
      %p44 = por %p42, %p43
      %p45 = scmp.ne.s32.totalorder %s37, %s40
      %p46 = scmp.eq.s32.totalorder %s11, 0
      %p47 = por %p45, %p46
      %p48 = scmp.ne.s32.totalorder %s37, %s40
      %p49 = scmp.eq.s32.totalorder %s16, 5
      %p50 = por %p48, %p49
      %p51 = scmp.ne.s32.totalorder %s40, %s41
      %p52 = scmp.eq.s32.totalorder %s16, 0
      %p53 = por %p51, %p52
      %p54 = scmp.ne.s32.totalorder %s40, %s41
      %p55 = scmp.eq.s32.totalorder %s17, 5
      %p56 = por %p54, %p55
      %p58 = scmp.ne.s32.totalorder %s41, %s57
      %p59 = scmp.eq.s32.totalorder %s17, 0
      %p60 = por %p58, %p59
      %s61 = smul.u32 %s18, 3
      %s62 = sadd.s32 %s61, %s19
      %s63 = smul.u32 %s30, 3
      %s64 = sadd.s32 %s63, %s26
      %s65 = ssub.s32 %s62, %s64
      %p66 = scmp.eq.s32.totalorder %s65, 0
      %s68 = sadd.s32 %s67, 1
      %s69 = scalar_select %p66, %s67, %s68
      %p72 = pneg %p66
      %p73 = scmp.eq.s32.totalorder %s11, 5
      %p74 = por %p72, %p73
      %p75 = scmp.ne.s32.totalorder %s67, %s70
      %p76 = scmp.eq.s32.totalorder %s11, 0
      %p77 = por %p75, %p76
      %p78 = scmp.ne.s32.totalorder %s67, %s70
      %p79 = scmp.eq.s32.totalorder %s16, 5
      %p80 = por %p78, %p79
      %p81 = scmp.ne.s32.totalorder %s70, %s71
      %p82 = scmp.eq.s32.totalorder %s16, 0
      %p83 = por %p81, %p82
      %p84 = scmp.ne.s32.totalorder %s70, %s71
      %p85 = scmp.eq.s32.totalorder %s17, 5
      %p86 = por %p84, %p85
      %p88 = scmp.ne.s32.totalorder %s71, %s87
      %p89 = scmp.eq.s32.totalorder %s17, 0
      %p90 = por %p88, %p89
      %s91 = ssub.s32 %s18, %s30
      %p92 = scmp.eq.s32.totalorder %s91, 0
      %s94 = sadd.s32 %s93, 1
      %s95 = scalar_select %p92, %s93, %s94
      %p98 = pneg %p92
      %p99 = scmp.eq.s32.totalorder %s11, 5
      %p100 = por %p98, %p99
      %p101 = scmp.ne.s32.totalorder %s93, %s96
      %p102 = scmp.eq.s32.totalorder %s11, 0
      %p103 = por %p101, %p102
      %p104 = scmp.ne.s32.totalorder %s93, %s96
      %p105 = scmp.eq.s32.totalorder %s16, 5
      %p106 = por %p104, %p105
      %p107 = scmp.ne.s32.totalorder %s96, %s97
      %p108 = scmp.eq.s32.totalorder %s16, 0
      %p109 = por %p107, %p108
      %p110 = scmp.ne.s32.totalorder %s96, %s97
      %p111 = scmp.eq.s32.totalorder %s17, 5
      %p112 = por %p110, %p111
      %p114 = scmp.ne.s32.totalorder %s97, %s113
      %p115 = scmp.eq.s32.totalorder %s17, 0
      %p116 = por %p114, %p115
      %p117 = scmp.le.s32.totalorder 1, %s11
      %p118 = scmp.lt.s32.totalorder %s11, 7
      %p119 = pnand %p117, %p118
      %p120 = pneg %p119
      // Predicated region
      $region9: #{yinkang_forward.1} parent=5 // pred_check
        _
      $region10: #{yinkang_forward.1} parent=5 // pred_check_branch
        %122 = sbr.rel (%p119) target = $region12
      $region11: #{yinkang_forward.1} parent=5 // pred_region
        %s123 = ssub.s32 %s11, 1
      $region12: #{yinkang_forward.1} parent=5 // pred_fallthru
        _
      %p124 = scmp.lt.s32.totalorder %s11, 6
      // Predicated region
      $region13: #{yinkang_forward.1} parent=5 // pred_check
        %p125 = pneg %p124
      $region14: #{yinkang_forward.1} parent=5 // pred_check_branch
        %127 = sbr.rel (%p125) target = $region16
      $region15: #{yinkang_forward.1} parent=5 // pred_region
        // Predicated region
        $region17: #{yinkang_forward.1} parent=15 // pred_check
          %p128 = pneg %p47
        $region18: #{yinkang_forward.1} parent=15 // pred_check_branch
          %130 = sbr.rel (%p128) target = $region20
        $region19: #{yinkang_forward.1} parent=15 // pred_region
          %s131 = smul.u32 %s18, 3
          %s132 = sadd.s32 %s131, %s19
          %s133 = smul.u32 256, %s132
          %p134 = scmp.lt.s32.totalorder %s133, 1535
          %s135 = scalar_select %p134, %s133, 1535
          %s136 = scalar_lea.vmem %s0, %s135
          %s137 = smul.u32 %s18, 3
          %s138 = sadd.s32 %s137, %s19
          %s139 = smul.u32 256, %s138
        $region20: #{yinkang_forward.1} parent=15 // pred_fallthru
          _
        // Predicated region
        $region21: #{yinkang_forward.1} parent=15 // pred_check
          %p140 = pneg %p77
        $region22: #{yinkang_forward.1} parent=15 // pred_check_branch
          %142 = sbr.rel (%p140) target = $region24
        $region23: #{yinkang_forward.1} parent=15 // pred_region
          %s143 = sand.u32 %s67, 1
          %s144 = scalar_lea.sflag [#allocation4], %s143
          %s145 = sand.u32 %s67, 1
          %s146 = smul.addr %s145, 4096
          %s147 = scalar_lea.vmem [#allocation3], %s146
          %s148 = smul.u32 %s18, 3
          %s149 = sadd.s32 %s148, %s19
          %s150 = smul.u32 256, %s149
          %152 = vsyncadd %s144, 0
          %s153 = smul.addr %s150, 8
          %s154 = scalar_lea.hbm %s1, %s153
          %s155 = sshll.u32 %s154, 4
          %s156 = int_to_ptr.hbm [resolvable:$true] %s155
          %s157 = sshll.u32 %s147, 4
          %s158 = int_to_ptr.vmem [resolvable:$true] %s157
          %163 = dma.hbm_to_vmem [thread:$0]  %s156, 65536, %s158, %s144, 196608, 32768, 2048
        $region24: #{yinkang_forward.1} parent=15 // pred_fallthru
          _
      $region16: #{yinkang_forward.1} parent=5 // pred_fallthru
        _
      %p164 = scmp.le.s32.totalorder 1, %s11
      %p165 = scmp.lt.s32.totalorder %s11, 7
      %p166 = pnand %p164, %p165
      %p167 = pneg %p166
      // Predicated region
      $region25: #{yinkang_forward.1} parent=5 // pred_check
        _
      $region26: #{yinkang_forward.1} parent=5 // pred_check_branch
        %169 = sbr.rel (%p166) target = $region28
      $region27: #{yinkang_forward.1} parent=5 // pred_region
        %s170 = ssub.s32 %s11, 1
        %s171 = sand.u32 %s70, 1
        %s172 = scalar_lea.sflag [#allocation4], %s171
        %s173 = sand.u32 %s70, 1
        %s174 = smul.addr %s173, 4096
        %s175 = scalar_lea.vmem [#allocation3], %s174
        // Predicated region
        $region29: #{yinkang_forward.1} parent=27 // pred_check
          %p176 = pneg %p83
        $region30: #{yinkang_forward.1} parent=27 // pred_check_branch
          %178 = sbr.rel (%p176) target = $region32
        $region31: #{yinkang_forward.1} parent=27 // pred_region
          %180 = dma.done %s172, 65536
        $region32: #{yinkang_forward.1} parent=27 // pred_fallthru
          _
        %s181 = smul.u32 %s20, 3
        %s182 = sadd.s32 %s181, %s21
        %s183 = smul.u32 256, %s182
        %p184 = scmp.lt.s32.totalorder %s183, 1535
        %s185 = scalar_select %p184, %s183, 1535
        %s186 = scalar_lea.vmem %s0, %s185
        %p187 = pneg %p53
        %p188 = pneg %p50
        %s189 = sand.u32 %s70, 1
        %s190 = scalar_lea.sflag [#allocation4], %s189
        %s191 = sand.u32 %s70, 1
        %s192 = smul.addr %s191, 4096
        %s193 = scalar_lea.vmem [#allocation3], %s192
        %p194 = pneg %p83
        %p195 = pneg %p80
        %p196 = pneg %p109
        %p197 = pneg %p106
        %p198 = scmp.lt.s32.totalorder %s20, 1
        %s199 = scalar_select %p198, %s20, 1
        %s200 = smul.addr %s199, 2
        %s201 = smul.addr %s200, 8
        %s202 = scalar_lea.vmem %s2, %s201
        %s203 = smul.u32 %s20, 3
        %s204 = sadd.s32 %s203, %s21
        %s205 = smul.u32 256, %s204
        %p206 = scmp.lt.s32.totalorder %s205, 1535
        %s207 = scalar_select %p206, %s205, 1535
        %s208 = scalar_lea.vmem %s0, %s207
        %s209 = smul.u32 %s20, 3
        %s210 = sadd.s32 %s209, %s21
        %s211 = smul.u32 256, %s210
        %s212 = smul.u32 %s20, 3
        %s213 = sadd.s32 %s212, %s21
        %s214 = smul.u32 256, %s213
        %p215 = scmp.lt.s32.totalorder %s20, 1
        %s216 = scalar_select %p215, %s20, 1
        %s217 = smul.addr %s216, 2
        %s218 = smul.addr %s217, 8
        %s219 = scalar_lea.vmem %s2, %s218
        %p220 = scmp.eq.s32.totalorder %s21, 0
        // Predicated region
        $region33: #{yinkang_forward.1} parent=27 // pred_check
          %p221 = pneg %p220
        $region34: #{yinkang_forward.1} parent=27 // pred_check_branch
          %223 = sbr.rel (%p221) target = $region36
        $region35: #{yinkang_forward.1} parent=27 // pred_region
          %vm224 = vcmask 7168
          %225 = vst.msk [vmem:[#allocation2] sm:$0xff] %vm224, 0.0
          %vm226 = vcmask 1024
          %227 = vst.msk [vmem:[#allocation2 + $0x8] sm:$0x3] %vm226, 0.0
        $region36: #{yinkang_forward.1} parent=27 // pred_fallthru
          _
        %v228 = vld [vmem:[%s175] sm:$0xff]
        %v229 = vld [vmem:[%s175 + $0x8] sm:$0xff]
        %v230 = vld [vmem:[%s175 + $0x10] sm:$0xff]
        %v231 = vld [vmem:[%s175 + $0x18] sm:$0xff]
        %v232 = vld [vmem:[%s175 + $0x20] sm:$0xff]
        %v233 = vld [vmem:[%s175 + $0x28] sm:$0xff]
        %v234 = vld [vmem:[%s175 + $0x30] sm:$0xff]
        %v235 = vld [vmem:[%s175 + $0x38] sm:$0xff]
        %v236 = vld [vmem:[%s175 + $0x40] sm:$0xff]
        %v237 = vld [vmem:[%s175 + $0x48] sm:$0xff]
        %v238 = vld [vmem:[%s175 + $0x50] sm:$0xff]
        %v239 = vld [vmem:[%s175 + $0x58] sm:$0xff]
        %v240 = vld [vmem:[%s175 + $0x60] sm:$0xff]
        %v241 = vld [vmem:[%s175 + $0x68] sm:$0xff]
        %v242 = vld [vmem:[%s175 + $0x70] sm:$0xff]
        %v243 = vld [vmem:[%s175 + $0x78] sm:$0xff]
        %v244 = vld [vmem:[%s175 + $0x80] sm:$0xff]
        %v245 = vld [vmem:[%s175 + $0x88] sm:$0xff]
        %v246 = vld [vmem:[%s175 + $0x90] sm:$0xff]
        %v247 = vld [vmem:[%s175 + $0x98] sm:$0xff]
        %v248 = vld [vmem:[%s175 + $0xa0] sm:$0xff]
        %v249 = vld [vmem:[%s175 + $0xa8] sm:$0xff]
        %v250 = vld [vmem:[%s175 + $0xb0] sm:$0xff]
        %v251 = vld [vmem:[%s175 + $0xb8] sm:$0xff]
        %v252 = vld [vmem:[%s175 + $0xc0] sm:$0xff]
        %v253 = vld [vmem:[%s175 + $0xc8] sm:$0xff]
        %v254 = vld [vmem:[%s175 + $0xd0] sm:$0xff]
        %v255 = vld [vmem:[%s175 + $0xd8] sm:$0xff]
        %v256 = vld [vmem:[%s175 + $0xe0] sm:$0xff]
        %v257 = vld [vmem:[%s175 + $0xe8] sm:$0xff]
        %v258 = vld [vmem:[%s175 + $0xf0] sm:$0xff]
        %v259 = vld [vmem:[%s175 + $0xf8] sm:$0xff]
        %v260 = vld [vmem:[%s175 + $0x100] sm:$0xff]
        %v261 = vld [vmem:[%s175 + $0x108] sm:$0xff]
        %v262 = vld [vmem:[%s175 + $0x110] sm:$0xff]
        %v263 = vld [vmem:[%s175 + $0x118] sm:$0xff]
        %v264 = vld [vmem:[%s175 + $0x120] sm:$0xff]
        %v265 = vld [vmem:[%s175 + $0x128] sm:$0xff]
        %v266 = vld [vmem:[%s175 + $0x130] sm:$0xff]
        %v267 = vld [vmem:[%s175 + $0x138] sm:$0xff]
        %v268 = vld [vmem:[%s175 + $0x140] sm:$0xff]
        %v269 = vld [vmem:[%s175 + $0x148] sm:$0xff]
        %v270 = vld [vmem:[%s175 + $0x150] sm:$0xff]
        %v271 = vld [vmem:[%s175 + $0x158] sm:$0xff]
        %v272 = vld [vmem:[%s175 + $0x160] sm:$0xff]
        %v273 = vld [vmem:[%s175 + $0x168] sm:$0xff]
        %v274 = vld [vmem:[%s175 + $0x170] sm:$0xff]
        %v275 = vld [vmem:[%s175 + $0x178] sm:$0xff]
        %v276 = vld [vmem:[%s175 + $0x180] sm:$0xff]
        %v277 = vld [vmem:[%s175 + $0x188] sm:$0xff]
        %v278 = vld [vmem:[%s175 + $0x190] sm:$0xff]
        %v279 = vld [vmem:[%s175 + $0x198] sm:$0xff]
        %v280 = vld [vmem:[%s175 + $0x1a0] sm:$0xff]
        %v281 = vld [vmem:[%s175 + $0x1a8] sm:$0xff]
        %v282 = vld [vmem:[%s175 + $0x1b0] sm:$0xff]
        %v283 = vld [vmem:[%s175 + $0x1b8] sm:$0xff]
        %v284 = vld [vmem:[%s175 + $0x1c0] sm:$0xff]
        %v285 = vld [vmem:[%s175 + $0x1c8] sm:$0xff]
        %v286 = vld [vmem:[%s175 + $0x1d0] sm:$0xff]
        %v287 = vld [vmem:[%s175 + $0x1d8] sm:$0xff]
        %v288 = vld [vmem:[%s175 + $0x1e0] sm:$0xff]
        %v289 = vld [vmem:[%s175 + $0x1e8] sm:$0xff]
        %v290 = vld [vmem:[%s175 + $0x1f0] sm:$0xff]
        %v291 = vld [vmem:[%s175 + $0x1f8] sm:$0xff]
        %v292 = vld [vmem:[%s175 + $0x200] sm:$0xff]
        %v293 = vld [vmem:[%s175 + $0x208] sm:$0xff]
        %v294 = vld [vmem:[%s175 + $0x210] sm:$0xff]
        %v295 = vld [vmem:[%s175 + $0x218] sm:$0xff]
        %v296 = vld [vmem:[%s175 + $0x220] sm:$0xff]
        %v297 = vld [vmem:[%s175 + $0x228] sm:$0xff]
        %v298 = vld [vmem:[%s175 + $0x230] sm:$0xff]
        %v299 = vld [vmem:[%s175 + $0x238] sm:$0xff]
        %v300 = vld [vmem:[%s175 + $0x240] sm:$0xff]
        %v301 = vld [vmem:[%s175 + $0x248] sm:$0xff]
        %v302 = vld [vmem:[%s175 + $0x250] sm:$0xff]
        %v303 = vld [vmem:[%s175 + $0x258] sm:$0xff]
        %v304 = vld [vmem:[%s175 + $0x260] sm:$0xff]
        %v305 = vld [vmem:[%s175 + $0x268] sm:$0xff]
        %v306 = vld [vmem:[%s175 + $0x270] sm:$0xff]
        %v307 = vld [vmem:[%s175 + $0x278] sm:$0xff]
        %v308 = vld [vmem:[%s175 + $0x280] sm:$0xff]
        %v309 = vld [vmem:[%s175 + $0x288] sm:$0xff]
        %v310 = vld [vmem:[%s175 + $0x290] sm:$0xff]
        %v311 = vld [vmem:[%s175 + $0x298] sm:$0xff]
        %v312 = vld [vmem:[%s175 + $0x2a0] sm:$0xff]
        %v313 = vld [vmem:[%s175 + $0x2a8] sm:$0xff]
        %v314 = vld [vmem:[%s175 + $0x2b0] sm:$0xff]
        %v315 = vld [vmem:[%s175 + $0x2b8] sm:$0xff]
        %v316 = vld [vmem:[%s175 + $0x2c0] sm:$0xff]
        %v317 = vld [vmem:[%s175 + $0x2c8] sm:$0xff]
        %v318 = vld [vmem:[%s175 + $0x2d0] sm:$0xff]
        %v319 = vld [vmem:[%s175 + $0x2d8] sm:$0xff]
        %v320 = vld [vmem:[%s175 + $0x2e0] sm:$0xff]
        %v321 = vld [vmem:[%s175 + $0x2e8] sm:$0xff]
        %v322 = vld [vmem:[%s175 + $0x2f0] sm:$0xff]
        %v323 = vld [vmem:[%s175 + $0x2f8] sm:$0xff]
        %v324 = vld [vmem:[%s175 + $0x300] sm:$0xff]
        %v325 = vld [vmem:[%s175 + $0x308] sm:$0xff]
        %v326 = vld [vmem:[%s175 + $0x310] sm:$0xff]
        %v327 = vld [vmem:[%s175 + $0x318] sm:$0xff]
        %v328 = vld [vmem:[%s175 + $0x320] sm:$0xff]
        %v329 = vld [vmem:[%s175 + $0x328] sm:$0xff]
        %v330 = vld [vmem:[%s175 + $0x330] sm:$0xff]
        %v331 = vld [vmem:[%s175 + $0x338] sm:$0xff]
        %v332 = vld [vmem:[%s175 + $0x340] sm:$0xff]
        %v333 = vld [vmem:[%s175 + $0x348] sm:$0xff]
        %v334 = vld [vmem:[%s175 + $0x350] sm:$0xff]
        %v335 = vld [vmem:[%s175 + $0x358] sm:$0xff]
        %v336 = vld [vmem:[%s175 + $0x360] sm:$0xff]
        %v337 = vld [vmem:[%s175 + $0x368] sm:$0xff]
        %v338 = vld [vmem:[%s175 + $0x370] sm:$0xff]
        %v339 = vld [vmem:[%s175 + $0x378] sm:$0xff]
        %v340 = vld [vmem:[%s175 + $0x380] sm:$0xff]
        %v341 = vld [vmem:[%s175 + $0x388] sm:$0xff]
        %v342 = vld [vmem:[%s175 + $0x390] sm:$0xff]
        %v343 = vld [vmem:[%s175 + $0x398] sm:$0xff]
        %v344 = vld [vmem:[%s175 + $0x3a0] sm:$0xff]
        %v345 = vld [vmem:[%s175 + $0x3a8] sm:$0xff]
        %v346 = vld [vmem:[%s175 + $0x3b0] sm:$0xff]
        %v347 = vld [vmem:[%s175 + $0x3b8] sm:$0xff]
        %v348 = vld [vmem:[%s175 + $0x3c0] sm:$0xff]
        %v349 = vld [vmem:[%s175 + $0x3c8] sm:$0xff]
        %v350 = vld [vmem:[%s175 + $0x3d0] sm:$0xff]
        %v351 = vld [vmem:[%s175 + $0x3d8] sm:$0xff]
        %v352 = vld [vmem:[%s175 + $0x3e0] sm:$0xff]
        %v353 = vld [vmem:[%s175 + $0x3e8] sm:$0xff]
        %v354 = vld [vmem:[%s175 + $0x3f0] sm:$0xff]
        %v355 = vld [vmem:[%s175 + $0x3f8] sm:$0xff]
        %v356 = vld [vmem:[%s175 + $0x400] sm:$0xff]
        %v357 = vld [vmem:[%s175 + $0x408] sm:$0xff]
        %v358 = vld [vmem:[%s175 + $0x410] sm:$0xff]
        %v359 = vld [vmem:[%s175 + $0x418] sm:$0xff]
        %v360 = vld [vmem:[%s175 + $0x420] sm:$0xff]
        %v361 = vld [vmem:[%s175 + $0x428] sm:$0xff]
        %v362 = vld [vmem:[%s175 + $0x430] sm:$0xff]
        %v363 = vld [vmem:[%s175 + $0x438] sm:$0xff]
        %v364 = vld [vmem:[%s175 + $0x440] sm:$0xff]
        %v365 = vld [vmem:[%s175 + $0x448] sm:$0xff]
        %v366 = vld [vmem:[%s175 + $0x450] sm:$0xff]
        %v367 = vld [vmem:[%s175 + $0x458] sm:$0xff]
        %v368 = vld [vmem:[%s175 + $0x460] sm:$0xff]
        %v369 = vld [vmem:[%s175 + $0x468] sm:$0xff]
        %v370 = vld [vmem:[%s175 + $0x470] sm:$0xff]
        %v371 = vld [vmem:[%s175 + $0x478] sm:$0xff]
        %v372 = vld [vmem:[%s175 + $0x480] sm:$0xff]
        %v373 = vld [vmem:[%s175 + $0x488] sm:$0xff]
        %v374 = vld [vmem:[%s175 + $0x490] sm:$0xff]
        %v375 = vld [vmem:[%s175 + $0x498] sm:$0xff]
        %v376 = vld [vmem:[%s175 + $0x4a0] sm:$0xff]
        %v377 = vld [vmem:[%s175 + $0x4a8] sm:$0xff]
        %v378 = vld [vmem:[%s175 + $0x4b0] sm:$0xff]
        %v379 = vld [vmem:[%s175 + $0x4b8] sm:$0xff]
        %v380 = vld [vmem:[%s175 + $0x4c0] sm:$0xff]
        %v381 = vld [vmem:[%s175 + $0x4c8] sm:$0xff]
        %v382 = vld [vmem:[%s175 + $0x4d0] sm:$0xff]
        %v383 = vld [vmem:[%s175 + $0x4d8] sm:$0xff]
        %v384 = vld [vmem:[%s175 + $0x4e0] sm:$0xff]
        %v385 = vld [vmem:[%s175 + $0x4e8] sm:$0xff]
        %v386 = vld [vmem:[%s175 + $0x4f0] sm:$0xff]
        %v387 = vld [vmem:[%s175 + $0x4f8] sm:$0xff]
        %v388 = vld [vmem:[%s175 + $0x500] sm:$0xff]
        %v389 = vld [vmem:[%s175 + $0x508] sm:$0xff]
        %v390 = vld [vmem:[%s175 + $0x510] sm:$0xff]
        %v391 = vld [vmem:[%s175 + $0x518] sm:$0xff]
        %v392 = vld [vmem:[%s175 + $0x520] sm:$0xff]
        %v393 = vld [vmem:[%s175 + $0x528] sm:$0xff]
        %v394 = vld [vmem:[%s175 + $0x530] sm:$0xff]
        %v395 = vld [vmem:[%s175 + $0x538] sm:$0xff]
        %v396 = vld [vmem:[%s175 + $0x540] sm:$0xff]
        %v397 = vld [vmem:[%s175 + $0x548] sm:$0xff]
        %v398 = vld [vmem:[%s175 + $0x550] sm:$0xff]
        %v399 = vld [vmem:[%s175 + $0x558] sm:$0xff]
        %v400 = vld [vmem:[%s175 + $0x560] sm:$0xff]
        %v401 = vld [vmem:[%s175 + $0x568] sm:$0xff]
        %v402 = vld [vmem:[%s175 + $0x570] sm:$0xff]
        %v403 = vld [vmem:[%s175 + $0x578] sm:$0xff]
        %v404 = vld [vmem:[%s175 + $0x580] sm:$0xff]
        %v405 = vld [vmem:[%s175 + $0x588] sm:$0xff]
        %v406 = vld [vmem:[%s175 + $0x590] sm:$0xff]
        %v407 = vld [vmem:[%s175 + $0x598] sm:$0xff]
        %v408 = vld [vmem:[%s175 + $0x5a0] sm:$0xff]
        %v409 = vld [vmem:[%s175 + $0x5a8] sm:$0xff]
        %v410 = vld [vmem:[%s175 + $0x5b0] sm:$0xff]
        %v411 = vld [vmem:[%s175 + $0x5b8] sm:$0xff]
        %v412 = vld [vmem:[%s175 + $0x5c0] sm:$0xff]
        %v413 = vld [vmem:[%s175 + $0x5c8] sm:$0xff]
        %v414 = vld [vmem:[%s175 + $0x5d0] sm:$0xff]
        %v415 = vld [vmem:[%s175 + $0x5d8] sm:$0xff]
        %v416 = vld [vmem:[%s175 + $0x5e0] sm:$0xff]
        %v417 = vld [vmem:[%s175 + $0x5e8] sm:$0xff]
        %v418 = vld [vmem:[%s175 + $0x5f0] sm:$0xff]
        %v419 = vld [vmem:[%s175 + $0x5f8] sm:$0xff]
        %v420 = vld [vmem:[%s175 + $0x600] sm:$0xff]
        %v421 = vld [vmem:[%s175 + $0x608] sm:$0xff]
        %v422 = vld [vmem:[%s175 + $0x610] sm:$0xff]
        %v423 = vld [vmem:[%s175 + $0x618] sm:$0xff]
        %v424 = vld [vmem:[%s175 + $0x620] sm:$0xff]
        %v425 = vld [vmem:[%s175 + $0x628] sm:$0xff]
        %v426 = vld [vmem:[%s175 + $0x630] sm:$0xff]
        %v427 = vld [vmem:[%s175 + $0x638] sm:$0xff]
        %v428 = vld [vmem:[%s175 + $0x640] sm:$0xff]
        %v429 = vld [vmem:[%s175 + $0x648] sm:$0xff]
        %v430 = vld [vmem:[%s175 + $0x650] sm:$0xff]
        %v431 = vld [vmem:[%s175 + $0x658] sm:$0xff]
        %v432 = vld [vmem:[%s175 + $0x660] sm:$0xff]
        %v433 = vld [vmem:[%s175 + $0x668] sm:$0xff]
        %v434 = vld [vmem:[%s175 + $0x670] sm:$0xff]
        %v435 = vld [vmem:[%s175 + $0x678] sm:$0xff]
        %v436 = vld [vmem:[%s175 + $0x680] sm:$0xff]
        %v437 = vld [vmem:[%s175 + $0x688] sm:$0xff]
        %v438 = vld [vmem:[%s175 + $0x690] sm:$0xff]
        %v439 = vld [vmem:[%s175 + $0x698] sm:$0xff]
        %v440 = vld [vmem:[%s175 + $0x6a0] sm:$0xff]
        %v441 = vld [vmem:[%s175 + $0x6a8] sm:$0xff]
        %v442 = vld [vmem:[%s175 + $0x6b0] sm:$0xff]
        %v443 = vld [vmem:[%s175 + $0x6b8] sm:$0xff]
        %v444 = vld [vmem:[%s175 + $0x6c0] sm:$0xff]
        %v445 = vld [vmem:[%s175 + $0x6c8] sm:$0xff]
        %v446 = vld [vmem:[%s175 + $0x6d0] sm:$0xff]
        %v447 = vld [vmem:[%s175 + $0x6d8] sm:$0xff]
        %v448 = vld [vmem:[%s175 + $0x6e0] sm:$0xff]
        %v449 = vld [vmem:[%s175 + $0x6e8] sm:$0xff]
        %v450 = vld [vmem:[%s175 + $0x6f0] sm:$0xff]
        %v451 = vld [vmem:[%s175 + $0x6f8] sm:$0xff]
        %v452 = vld [vmem:[%s175 + $0x700] sm:$0xff]
        %v453 = vld [vmem:[%s175 + $0x708] sm:$0xff]
        %v454 = vld [vmem:[%s175 + $0x710] sm:$0xff]
        %v455 = vld [vmem:[%s175 + $0x718] sm:$0xff]
        %v456 = vld [vmem:[%s175 + $0x720] sm:$0xff]
        %v457 = vld [vmem:[%s175 + $0x728] sm:$0xff]
        %v458 = vld [vmem:[%s175 + $0x730] sm:$0xff]
        %v459 = vld [vmem:[%s175 + $0x738] sm:$0xff]
        %v460 = vld [vmem:[%s175 + $0x740] sm:$0xff]
        %v461 = vld [vmem:[%s175 + $0x748] sm:$0xff]
        %v462 = vld [vmem:[%s175 + $0x750] sm:$0xff]
        %v463 = vld [vmem:[%s175 + $0x758] sm:$0xff]
        %v464 = vld [vmem:[%s175 + $0x760] sm:$0xff]
        %v465 = vld [vmem:[%s175 + $0x768] sm:$0xff]
        %v466 = vld [vmem:[%s175 + $0x770] sm:$0xff]
        %v467 = vld [vmem:[%s175 + $0x778] sm:$0xff]
        %v468 = vld [vmem:[%s175 + $0x780] sm:$0xff]
        %v469 = vld [vmem:[%s175 + $0x788] sm:$0xff]
        %v470 = vld [vmem:[%s175 + $0x790] sm:$0xff]
        %v471 = vld [vmem:[%s175 + $0x798] sm:$0xff]
        %v472 = vld [vmem:[%s175 + $0x7a0] sm:$0xff]
        %v473 = vld [vmem:[%s175 + $0x7a8] sm:$0xff]
        %v474 = vld [vmem:[%s175 + $0x7b0] sm:$0xff]
        %v475 = vld [vmem:[%s175 + $0x7b8] sm:$0xff]
        %v476 = vld [vmem:[%s175 + $0x7c0] sm:$0xff]
        %v477 = vld [vmem:[%s175 + $0x7c8] sm:$0xff]
        %v478 = vld [vmem:[%s175 + $0x7d0] sm:$0xff]
        %v479 = vld [vmem:[%s175 + $0x7d8] sm:$0xff]
        %v480 = vld [vmem:[%s175 + $0x7e0] sm:$0xff]
        %v481 = vld [vmem:[%s175 + $0x7e8] sm:$0xff]
        %v482 = vld [vmem:[%s175 + $0x7f0] sm:$0xff]
        %v483 = vld [vmem:[%s175 + $0x7f8] sm:$0xff]
        %v484 = vld [vmem:[%s175 + $0x800] sm:$0x3]
        %v485 = vld [vmem:[%s175 + $0x808] sm:$0x3]
        %v486 = vld [vmem:[%s175 + $0x810] sm:$0x3]
        %v487 = vld [vmem:[%s175 + $0x818] sm:$0x3]
        %v488 = vld [vmem:[%s175 + $0x820] sm:$0x3]
        %v489 = vld [vmem:[%s175 + $0x828] sm:$0x3]
        %v490 = vld [vmem:[%s175 + $0x830] sm:$0x3]
        %v491 = vld [vmem:[%s175 + $0x838] sm:$0x3]
        %v492 = vld [vmem:[%s175 + $0x840] sm:$0x3]
        %v493 = vld [vmem:[%s175 + $0x848] sm:$0x3]
        %v494 = vld [vmem:[%s175 + $0x850] sm:$0x3]
        %v495 = vld [vmem:[%s175 + $0x858] sm:$0x3]
        %v496 = vld [vmem:[%s175 + $0x860] sm:$0x3]
        %v497 = vld [vmem:[%s175 + $0x868] sm:$0x3]
        %v498 = vld [vmem:[%s175 + $0x870] sm:$0x3]
        %v499 = vld [vmem:[%s175 + $0x878] sm:$0x3]
        %v500 = vld [vmem:[%s175 + $0x880] sm:$0x3]
        %v501 = vld [vmem:[%s175 + $0x888] sm:$0x3]
        %v502 = vld [vmem:[%s175 + $0x890] sm:$0x3]
        %v503 = vld [vmem:[%s175 + $0x898] sm:$0x3]
        %v504 = vld [vmem:[%s175 + $0x8a0] sm:$0x3]
        %v505 = vld [vmem:[%s175 + $0x8a8] sm:$0x3]
        %v506 = vld [vmem:[%s175 + $0x8b0] sm:$0x3]
        %v507 = vld [vmem:[%s175 + $0x8b8] sm:$0x3]
        %v508 = vld [vmem:[%s175 + $0x8c0] sm:$0x3]
        %v509 = vld [vmem:[%s175 + $0x8c8] sm:$0x3]
        %v510 = vld [vmem:[%s175 + $0x8d0] sm:$0x3]
        %v511 = vld [vmem:[%s175 + $0x8d8] sm:$0x3]
        %v512 = vld [vmem:[%s175 + $0x8e0] sm:$0x3]
        %v513 = vld [vmem:[%s175 + $0x8e8] sm:$0x3]
        %v514 = vld [vmem:[%s175 + $0x8f0] sm:$0x3]
        %v515 = vld [vmem:[%s175 + $0x8f8] sm:$0x3]
        %v516 = vld [vmem:[%s175 + $0x900] sm:$0x3]
        %v517 = vld [vmem:[%s175 + $0x908] sm:$0x3]
        %v518 = vld [vmem:[%s175 + $0x910] sm:$0x3]
        %v519 = vld [vmem:[%s175 + $0x918] sm:$0x3]
        %v520 = vld [vmem:[%s175 + $0x920] sm:$0x3]
        %v521 = vld [vmem:[%s175 + $0x928] sm:$0x3]
        %v522 = vld [vmem:[%s175 + $0x930] sm:$0x3]
        %v523 = vld [vmem:[%s175 + $0x938] sm:$0x3]
        %v524 = vld [vmem:[%s175 + $0x940] sm:$0x3]
        %v525 = vld [vmem:[%s175 + $0x948] sm:$0x3]
        %v526 = vld [vmem:[%s175 + $0x950] sm:$0x3]
        %v527 = vld [vmem:[%s175 + $0x958] sm:$0x3]
        %v528 = vld [vmem:[%s175 + $0x960] sm:$0x3]
        %v529 = vld [vmem:[%s175 + $0x968] sm:$0x3]
        %v530 = vld [vmem:[%s175 + $0x970] sm:$0x3]
        %v531 = vld [vmem:[%s175 + $0x978] sm:$0x3]
        %v532 = vld [vmem:[%s175 + $0x980] sm:$0x3]
        %v533 = vld [vmem:[%s175 + $0x988] sm:$0x3]
        %v534 = vld [vmem:[%s175 + $0x990] sm:$0x3]
        %v535 = vld [vmem:[%s175 + $0x998] sm:$0x3]
        %v536 = vld [vmem:[%s175 + $0x9a0] sm:$0x3]
        %v537 = vld [vmem:[%s175 + $0x9a8] sm:$0x3]
        %v538 = vld [vmem:[%s175 + $0x9b0] sm:$0x3]
        %v539 = vld [vmem:[%s175 + $0x9b8] sm:$0x3]
        %v540 = vld [vmem:[%s175 + $0x9c0] sm:$0x3]
        %v541 = vld [vmem:[%s175 + $0x9c8] sm:$0x3]
        %v542 = vld [vmem:[%s175 + $0x9d0] sm:$0x3]
        %v543 = vld [vmem:[%s175 + $0x9d8] sm:$0x3]
        %v544 = vld [vmem:[%s175 + $0x9e0] sm:$0x3]
        %v545 = vld [vmem:[%s175 + $0x9e8] sm:$0x3]
        %v546 = vld [vmem:[%s175 + $0x9f0] sm:$0x3]
        %v547 = vld [vmem:[%s175 + $0x9f8] sm:$0x3]
        %v548 = vld [vmem:[%s175 + $0xa00] sm:$0x3]
        %v549 = vld [vmem:[%s175 + $0xa08] sm:$0x3]
        %v550 = vld [vmem:[%s175 + $0xa10] sm:$0x3]
        %v551 = vld [vmem:[%s175 + $0xa18] sm:$0x3]
        %v552 = vld [vmem:[%s175 + $0xa20] sm:$0x3]
        %v553 = vld [vmem:[%s175 + $0xa28] sm:$0x3]
        %v554 = vld [vmem:[%s175 + $0xa30] sm:$0x3]
        %v555 = vld [vmem:[%s175 + $0xa38] sm:$0x3]
        %v556 = vld [vmem:[%s175 + $0xa40] sm:$0x3]
        %v557 = vld [vmem:[%s175 + $0xa48] sm:$0x3]
        %v558 = vld [vmem:[%s175 + $0xa50] sm:$0x3]
        %v559 = vld [vmem:[%s175 + $0xa58] sm:$0x3]
        %v560 = vld [vmem:[%s175 + $0xa60] sm:$0x3]
        %v561 = vld [vmem:[%s175 + $0xa68] sm:$0x3]
        %v562 = vld [vmem:[%s175 + $0xa70] sm:$0x3]
        %v563 = vld [vmem:[%s175 + $0xa78] sm:$0x3]
        %v564 = vld [vmem:[%s175 + $0xa80] sm:$0x3]
        %v565 = vld [vmem:[%s175 + $0xa88] sm:$0x3]
        %v566 = vld [vmem:[%s175 + $0xa90] sm:$0x3]
        %v567 = vld [vmem:[%s175 + $0xa98] sm:$0x3]
        %v568 = vld [vmem:[%s175 + $0xaa0] sm:$0x3]
        %v569 = vld [vmem:[%s175 + $0xaa8] sm:$0x3]
        %v570 = vld [vmem:[%s175 + $0xab0] sm:$0x3]
        %v571 = vld [vmem:[%s175 + $0xab8] sm:$0x3]
        %v572 = vld [vmem:[%s175 + $0xac0] sm:$0x3]
        %v573 = vld [vmem:[%s175 + $0xac8] sm:$0x3]
        %v574 = vld [vmem:[%s175 + $0xad0] sm:$0x3]
        %v575 = vld [vmem:[%s175 + $0xad8] sm:$0x3]
        %v576 = vld [vmem:[%s175 + $0xae0] sm:$0x3]
        %v577 = vld [vmem:[%s175 + $0xae8] sm:$0x3]
        %v578 = vld [vmem:[%s175 + $0xaf0] sm:$0x3]
        %v579 = vld [vmem:[%s175 + $0xaf8] sm:$0x3]
        %v580 = vld [vmem:[%s175 + $0xb00] sm:$0x3]
        %v581 = vld [vmem:[%s175 + $0xb08] sm:$0x3]
        %v582 = vld [vmem:[%s175 + $0xb10] sm:$0x3]
        %v583 = vld [vmem:[%s175 + $0xb18] sm:$0x3]
        %v584 = vld [vmem:[%s175 + $0xb20] sm:$0x3]
        %v585 = vld [vmem:[%s175 + $0xb28] sm:$0x3]
        %v586 = vld [vmem:[%s175 + $0xb30] sm:$0x3]
        %v587 = vld [vmem:[%s175 + $0xb38] sm:$0x3]
        %v588 = vld [vmem:[%s175 + $0xb40] sm:$0x3]
        %v589 = vld [vmem:[%s175 + $0xb48] sm:$0x3]
        %v590 = vld [vmem:[%s175 + $0xb50] sm:$0x3]
        %v591 = vld [vmem:[%s175 + $0xb58] sm:$0x3]
        %v592 = vld [vmem:[%s175 + $0xb60] sm:$0x3]
        %v593 = vld [vmem:[%s175 + $0xb68] sm:$0x3]
        %v594 = vld [vmem:[%s175 + $0xb70] sm:$0x3]
        %v595 = vld [vmem:[%s175 + $0xb78] sm:$0x3]
        %v596 = vld [vmem:[%s175 + $0xb80] sm:$0x3]
        %v597 = vld [vmem:[%s175 + $0xb88] sm:$0x3]
        %v598 = vld [vmem:[%s175 + $0xb90] sm:$0x3]
        %v599 = vld [vmem:[%s175 + $0xb98] sm:$0x3]
        %v600 = vld [vmem:[%s175 + $0xba0] sm:$0x3]
        %v601 = vld [vmem:[%s175 + $0xba8] sm:$0x3]
        %v602 = vld [vmem:[%s175 + $0xbb0] sm:$0x3]
        %v603 = vld [vmem:[%s175 + $0xbb8] sm:$0x3]
        %v604 = vld [vmem:[%s175 + $0xbc0] sm:$0x3]
        %v605 = vld [vmem:[%s175 + $0xbc8] sm:$0x3]
        %v606 = vld [vmem:[%s175 + $0xbd0] sm:$0x3]
        %v607 = vld [vmem:[%s175 + $0xbd8] sm:$0x3]
        %v608 = vld [vmem:[%s175 + $0xbe0] sm:$0x3]
        %v609 = vld [vmem:[%s175 + $0xbe8] sm:$0x3]
        %v610 = vld [vmem:[%s175 + $0xbf0] sm:$0x3]
        %v611 = vld [vmem:[%s175 + $0xbf8] sm:$0x3]
        %v612 = vld [vmem:[%s175 + $0xc00] sm:$0x3]
        %v613 = vld [vmem:[%s175 + $0xc08] sm:$0x3]
        %v614 = vld [vmem:[%s175 + $0xc10] sm:$0x3]
        %v615 = vld [vmem:[%s175 + $0xc18] sm:$0x3]
        %v616 = vld [vmem:[%s175 + $0xc20] sm:$0x3]
        %v617 = vld [vmem:[%s175 + $0xc28] sm:$0x3]
        %v618 = vld [vmem:[%s175 + $0xc30] sm:$0x3]
        %v619 = vld [vmem:[%s175 + $0xc38] sm:$0x3]
        %v620 = vld [vmem:[%s175 + $0xc40] sm:$0x3]
        %v621 = vld [vmem:[%s175 + $0xc48] sm:$0x3]
        %v622 = vld [vmem:[%s175 + $0xc50] sm:$0x3]
        %v623 = vld [vmem:[%s175 + $0xc58] sm:$0x3]
        %v624 = vld [vmem:[%s175 + $0xc60] sm:$0x3]
        %v625 = vld [vmem:[%s175 + $0xc68] sm:$0x3]
        %v626 = vld [vmem:[%s175 + $0xc70] sm:$0x3]
        %v627 = vld [vmem:[%s175 + $0xc78] sm:$0x3]
        %v628 = vld [vmem:[%s175 + $0xc80] sm:$0x3]
        %v629 = vld [vmem:[%s175 + $0xc88] sm:$0x3]
        %v630 = vld [vmem:[%s175 + $0xc90] sm:$0x3]
        %v631 = vld [vmem:[%s175 + $0xc98] sm:$0x3]
        %v632 = vld [vmem:[%s175 + $0xca0] sm:$0x3]
        %v633 = vld [vmem:[%s175 + $0xca8] sm:$0x3]
        %v634 = vld [vmem:[%s175 + $0xcb0] sm:$0x3]
        %v635 = vld [vmem:[%s175 + $0xcb8] sm:$0x3]
        %v636 = vld [vmem:[%s175 + $0xcc0] sm:$0x3]
        %v637 = vld [vmem:[%s175 + $0xcc8] sm:$0x3]
        %v638 = vld [vmem:[%s175 + $0xcd0] sm:$0x3]
        %v639 = vld [vmem:[%s175 + $0xcd8] sm:$0x3]
        %v640 = vld [vmem:[%s175 + $0xce0] sm:$0x3]
        %v641 = vld [vmem:[%s175 + $0xce8] sm:$0x3]
        %v642 = vld [vmem:[%s175 + $0xcf0] sm:$0x3]
        %v643 = vld [vmem:[%s175 + $0xcf8] sm:$0x3]
        %v644 = vld [vmem:[%s175 + $0xd00] sm:$0x3]
        %v645 = vld [vmem:[%s175 + $0xd08] sm:$0x3]
        %v646 = vld [vmem:[%s175 + $0xd10] sm:$0x3]
        %v647 = vld [vmem:[%s175 + $0xd18] sm:$0x3]
        %v648 = vld [vmem:[%s175 + $0xd20] sm:$0x3]
        %v649 = vld [vmem:[%s175 + $0xd28] sm:$0x3]
        %v650 = vld [vmem:[%s175 + $0xd30] sm:$0x3]
        %v651 = vld [vmem:[%s175 + $0xd38] sm:$0x3]
        %v652 = vld [vmem:[%s175 + $0xd40] sm:$0x3]
        %v653 = vld [vmem:[%s175 + $0xd48] sm:$0x3]
        %v654 = vld [vmem:[%s175 + $0xd50] sm:$0x3]
        %v655 = vld [vmem:[%s175 + $0xd58] sm:$0x3]
        %v656 = vld [vmem:[%s175 + $0xd60] sm:$0x3]
        %v657 = vld [vmem:[%s175 + $0xd68] sm:$0x3]
        %v658 = vld [vmem:[%s175 + $0xd70] sm:$0x3]
        %v659 = vld [vmem:[%s175 + $0xd78] sm:$0x3]
        %v660 = vld [vmem:[%s175 + $0xd80] sm:$0x3]
        %v661 = vld [vmem:[%s175 + $0xd88] sm:$0x3]
        %v662 = vld [vmem:[%s175 + $0xd90] sm:$0x3]
        %v663 = vld [vmem:[%s175 + $0xd98] sm:$0x3]
        %v664 = vld [vmem:[%s175 + $0xda0] sm:$0x3]
        %v665 = vld [vmem:[%s175 + $0xda8] sm:$0x3]
        %v666 = vld [vmem:[%s175 + $0xdb0] sm:$0x3]
        %v667 = vld [vmem:[%s175 + $0xdb8] sm:$0x3]
        %v668 = vld [vmem:[%s175 + $0xdc0] sm:$0x3]
        %v669 = vld [vmem:[%s175 + $0xdc8] sm:$0x3]
        %v670 = vld [vmem:[%s175 + $0xdd0] sm:$0x3]
        %v671 = vld [vmem:[%s175 + $0xdd8] sm:$0x3]
        %v672 = vld [vmem:[%s175 + $0xde0] sm:$0x3]
        %v673 = vld [vmem:[%s175 + $0xde8] sm:$0x3]
        %v674 = vld [vmem:[%s175 + $0xdf0] sm:$0x3]
        %v675 = vld [vmem:[%s175 + $0xdf8] sm:$0x3]
        %v676 = vld [vmem:[%s175 + $0xe00] sm:$0x3]
        %v677 = vld [vmem:[%s175 + $0xe08] sm:$0x3]
        %v678 = vld [vmem:[%s175 + $0xe10] sm:$0x3]
        %v679 = vld [vmem:[%s175 + $0xe18] sm:$0x3]
        %v680 = vld [vmem:[%s175 + $0xe20] sm:$0x3]
        %v681 = vld [vmem:[%s175 + $0xe28] sm:$0x3]
        %v682 = vld [vmem:[%s175 + $0xe30] sm:$0x3]
        %v683 = vld [vmem:[%s175 + $0xe38] sm:$0x3]
        %v684 = vld [vmem:[%s175 + $0xe40] sm:$0x3]
        %v685 = vld [vmem:[%s175 + $0xe48] sm:$0x3]
        %v686 = vld [vmem:[%s175 + $0xe50] sm:$0x3]
        %v687 = vld [vmem:[%s175 + $0xe58] sm:$0x3]
        %v688 = vld [vmem:[%s175 + $0xe60] sm:$0x3]
        %v689 = vld [vmem:[%s175 + $0xe68] sm:$0x3]
        %v690 = vld [vmem:[%s175 + $0xe70] sm:$0x3]
        %v691 = vld [vmem:[%s175 + $0xe78] sm:$0x3]
        %v692 = vld [vmem:[%s175 + $0xe80] sm:$0x3]
        %v693 = vld [vmem:[%s175 + $0xe88] sm:$0x3]
        %v694 = vld [vmem:[%s175 + $0xe90] sm:$0x3]
        %v695 = vld [vmem:[%s175 + $0xe98] sm:$0x3]
        %v696 = vld [vmem:[%s175 + $0xea0] sm:$0x3]
        %v697 = vld [vmem:[%s175 + $0xea8] sm:$0x3]
        %v698 = vld [vmem:[%s175 + $0xeb0] sm:$0x3]
        %v699 = vld [vmem:[%s175 + $0xeb8] sm:$0x3]
        %v700 = vld [vmem:[%s175 + $0xec0] sm:$0x3]
        %v701 = vld [vmem:[%s175 + $0xec8] sm:$0x3]
        %v702 = vld [vmem:[%s175 + $0xed0] sm:$0x3]
        %v703 = vld [vmem:[%s175 + $0xed8] sm:$0x3]
        %v704 = vld [vmem:[%s175 + $0xee0] sm:$0x3]
        %v705 = vld [vmem:[%s175 + $0xee8] sm:$0x3]
        %v706 = vld [vmem:[%s175 + $0xef0] sm:$0x3]
        %v707 = vld [vmem:[%s175 + $0xef8] sm:$0x3]
        %v708 = vld [vmem:[%s175 + $0xf00] sm:$0x3]
        %v709 = vld [vmem:[%s175 + $0xf08] sm:$0x3]
        %v710 = vld [vmem:[%s175 + $0xf10] sm:$0x3]
        %v711 = vld [vmem:[%s175 + $0xf18] sm:$0x3]
        %v712 = vld [vmem:[%s175 + $0xf20] sm:$0x3]
        %v713 = vld [vmem:[%s175 + $0xf28] sm:$0x3]
        %v714 = vld [vmem:[%s175 + $0xf30] sm:$0x3]
        %v715 = vld [vmem:[%s175 + $0xf38] sm:$0x3]
        %v716 = vld [vmem:[%s175 + $0xf40] sm:$0x3]
        %v717 = vld [vmem:[%s175 + $0xf48] sm:$0x3]
        %v718 = vld [vmem:[%s175 + $0xf50] sm:$0x3]
        %v719 = vld [vmem:[%s175 + $0xf58] sm:$0x3]
        %v720 = vld [vmem:[%s175 + $0xf60] sm:$0x3]
        %v721 = vld [vmem:[%s175 + $0xf68] sm:$0x3]
        %v722 = vld [vmem:[%s175 + $0xf70] sm:$0x3]
        %v723 = vld [vmem:[%s175 + $0xf78] sm:$0x3]
        %v724 = vld [vmem:[%s175 + $0xf80] sm:$0x3]
        %v725 = vld [vmem:[%s175 + $0xf88] sm:$0x3]
        %v726 = vld [vmem:[%s175 + $0xf90] sm:$0x3]
        %v727 = vld [vmem:[%s175 + $0xf98] sm:$0x3]
        %v728 = vld [vmem:[%s175 + $0xfa0] sm:$0x3]
        %v729 = vld [vmem:[%s175 + $0xfa8] sm:$0x3]
        %v730 = vld [vmem:[%s175 + $0xfb0] sm:$0x3]
        %v731 = vld [vmem:[%s175 + $0xfb8] sm:$0x3]
        %v732 = vld [vmem:[%s175 + $0xfc0] sm:$0x3]
        %v733 = vld [vmem:[%s175 + $0xfc8] sm:$0x3]
        %v734 = vld [vmem:[%s175 + $0xfd0] sm:$0x3]
        %v735 = vld [vmem:[%s175 + $0xfd8] sm:$0x3]
        %v736 = vld [vmem:[%s175 + $0xfe0] sm:$0x3]
        %v737 = vld [vmem:[%s175 + $0xfe8] sm:$0x3]
        %v738 = vld [vmem:[%s175 + $0xff0] sm:$0x3]
        %v739 = vld [vmem:[%s175 + $0xff8] sm:$0x3]
        %v740 = vld [vmem:[%s208] sm:$0xff]
        %v741 = vld [vmem:[%s208 + $0x8] sm:$0xff]
        %v742 = vld [vmem:[%s208 + $0x10] sm:$0xff]
        %v743 = vld [vmem:[%s208 + $0x18] sm:$0xff]
        %v744 = vld [vmem:[%s208 + $0x20] sm:$0xff]
        %v745 = vld [vmem:[%s208 + $0x28] sm:$0xff]
        %v746 = vld [vmem:[%s208 + $0x30] sm:$0xff]
        %v747 = vld [vmem:[%s208 + $0x38] sm:$0xff]
        %v748 = vld [vmem:[%s208 + $0x40] sm:$0xff]
        %v749 = vld [vmem:[%s208 + $0x48] sm:$0xff]
        %v750 = vld [vmem:[%s208 + $0x50] sm:$0xff]
        %v751 = vld [vmem:[%s208 + $0x58] sm:$0xff]
        %v752 = vld [vmem:[%s208 + $0x60] sm:$0xff]
        %v753 = vld [vmem:[%s208 + $0x68] sm:$0xff]
        %v754 = vld [vmem:[%s208 + $0x70] sm:$0xff]
        %v755 = vld [vmem:[%s208 + $0x78] sm:$0xff]
        %v756 = vld [vmem:[%s208 + $0x80] sm:$0xff]
        %v757 = vld [vmem:[%s208 + $0x88] sm:$0xff]
        %v758 = vld [vmem:[%s208 + $0x90] sm:$0xff]
        %v759 = vld [vmem:[%s208 + $0x98] sm:$0xff]
        %v760 = vld [vmem:[%s208 + $0xa0] sm:$0xff]
        %v761 = vld [vmem:[%s208 + $0xa8] sm:$0xff]
        %v762 = vld [vmem:[%s208 + $0xb0] sm:$0xff]
        %v763 = vld [vmem:[%s208 + $0xb8] sm:$0xff]
        %v764 = vld [vmem:[%s208 + $0xc0] sm:$0xff]
        %v765 = vld [vmem:[%s208 + $0xc8] sm:$0xff]
        %v766 = vld [vmem:[%s208 + $0xd0] sm:$0xff]
        %v767 = vld [vmem:[%s208 + $0xd8] sm:$0xff]
        %v768 = vld [vmem:[%s208 + $0xe0] sm:$0xff]
        %v769 = vld [vmem:[%s208 + $0xe8] sm:$0xff]
        %v770 = vld [vmem:[%s208 + $0xf0] sm:$0xff]
        %v771 = vld [vmem:[%s208 + $0xf8] sm:$0xff]
        %v804 = vperm.slane %v740, 0
        %v805 = vperm.slane %v740, 1
        %v806 = vperm.slane %v740, 2
        %v807 = vperm.slane %v740, 3
        %v808 = vperm.slane %v740, 4
        %v809 = vperm.slane %v740, 5
        %v810 = vperm.slane %v740, 6
        %v811 = vperm.slane %v740, 7
        %v812 = vperm.slane %v741, 0
        %v813 = vperm.slane %v741, 1
        %v814 = vperm.slane %v741, 2
        %v815 = vperm.slane %v741, 3
        %v816 = vperm.slane %v741, 4
        %v817 = vperm.slane %v741, 5
        %v818 = vperm.slane %v741, 6
        %v819 = vperm.slane %v741, 7
        %v820 = vperm.slane %v742, 0
        %v821 = vperm.slane %v742, 1
        %v822 = vperm.slane %v742, 2
        %v823 = vperm.slane %v742, 3
        %v824 = vperm.slane %v742, 4
        %v825 = vperm.slane %v742, 5
        %v826 = vperm.slane %v742, 6
        %v827 = vperm.slane %v742, 7
        %v828 = vperm.slane %v743, 0
        %v829 = vperm.slane %v743, 1
        %v830 = vperm.slane %v743, 2
        %v831 = vperm.slane %v743, 3
        %v832 = vperm.slane %v743, 4
        %v833 = vperm.slane %v743, 5
        %v834 = vperm.slane %v743, 6
        %v835 = vperm.slane %v743, 7
        %v836 = vperm.slane %v744, 0
        %v837 = vperm.slane %v744, 1
        %v838 = vperm.slane %v744, 2
        %v839 = vperm.slane %v744, 3
        %v840 = vperm.slane %v744, 4
        %v841 = vperm.slane %v744, 5
        %v842 = vperm.slane %v744, 6
        %v843 = vperm.slane %v744, 7
        %v844 = vperm.slane %v745, 0
        %v845 = vperm.slane %v745, 1
        %v846 = vperm.slane %v745, 2
        %v847 = vperm.slane %v745, 3
        %v848 = vperm.slane %v745, 4
        %v849 = vperm.slane %v745, 5
        %v850 = vperm.slane %v745, 6
        %v851 = vperm.slane %v745, 7
        %v852 = vperm.slane %v746, 0
        %v853 = vperm.slane %v746, 1
        %v854 = vperm.slane %v746, 2
        %v855 = vperm.slane %v746, 3
        %v856 = vperm.slane %v746, 4
        %v857 = vperm.slane %v746, 5
        %v858 = vperm.slane %v746, 6
        %v859 = vperm.slane %v746, 7
        %v860 = vperm.slane %v747, 0
        %v861 = vperm.slane %v747, 1
        %v862 = vperm.slane %v747, 2
        %v863 = vperm.slane %v747, 3
        %v864 = vperm.slane %v747, 4
        %v865 = vperm.slane %v747, 5
        %v866 = vperm.slane %v747, 6
        %v867 = vperm.slane %v747, 7
        %v868 = vperm.slane %v748, 0
        %v869 = vperm.slane %v748, 1
        %v870 = vperm.slane %v748, 2
        %v871 = vperm.slane %v748, 3
        %v872 = vperm.slane %v748, 4
        %v873 = vperm.slane %v748, 5
        %v874 = vperm.slane %v748, 6
        %v875 = vperm.slane %v748, 7
        %v876 = vperm.slane %v749, 0
        %v877 = vperm.slane %v749, 1
        %v878 = vperm.slane %v749, 2
        %v879 = vperm.slane %v749, 3
        %v880 = vperm.slane %v749, 4
        %v881 = vperm.slane %v749, 5
        %v882 = vperm.slane %v749, 6
        %v883 = vperm.slane %v749, 7
        %v884 = vperm.slane %v750, 0
        %v885 = vperm.slane %v750, 1
        %v886 = vperm.slane %v750, 2
        %v887 = vperm.slane %v750, 3
        %v888 = vperm.slane %v750, 4
        %v889 = vperm.slane %v750, 5
        %v890 = vperm.slane %v750, 6
        %v891 = vperm.slane %v750, 7
        %v892 = vperm.slane %v751, 0
        %v893 = vperm.slane %v751, 1
        %v894 = vperm.slane %v751, 2
        %v895 = vperm.slane %v751, 3
        %v896 = vperm.slane %v751, 4
        %v897 = vperm.slane %v751, 5
        %v898 = vperm.slane %v751, 6
        %v899 = vperm.slane %v751, 7
        %v900 = vperm.slane %v752, 0
        %v901 = vperm.slane %v752, 1
        %v902 = vperm.slane %v752, 2
        %v903 = vperm.slane %v752, 3
        %v904 = vperm.slane %v752, 4
        %v905 = vperm.slane %v752, 5
        %v906 = vperm.slane %v752, 6
        %v907 = vperm.slane %v752, 7
        %v908 = vperm.slane %v753, 0
        %v909 = vperm.slane %v753, 1
        %v910 = vperm.slane %v753, 2
        %v911 = vperm.slane %v753, 3
        %v912 = vperm.slane %v753, 4
        %v913 = vperm.slane %v753, 5
        %v914 = vperm.slane %v753, 6
        %v915 = vperm.slane %v753, 7
        %v916 = vperm.slane %v754, 0
        %v917 = vperm.slane %v754, 1
        %v918 = vperm.slane %v754, 2
        %v919 = vperm.slane %v754, 3
        %v920 = vperm.slane %v754, 4
        %v921 = vperm.slane %v754, 5
        %v922 = vperm.slane %v754, 6
        %v923 = vperm.slane %v754, 7
        %v924 = vperm.slane %v755, 0
        %v925 = vperm.slane %v755, 1
        %v926 = vperm.slane %v755, 2
        %v927 = vperm.slane %v755, 3
        %v928 = vperm.slane %v755, 4
        %v929 = vperm.slane %v755, 5
        %v930 = vperm.slane %v755, 6
        %v931 = vperm.slane %v755, 7
        %v932 = vperm.slane %v756, 0
        %v933 = vperm.slane %v756, 1
        %v934 = vperm.slane %v756, 2
        %v935 = vperm.slane %v756, 3
        %v936 = vperm.slane %v756, 4
        %v937 = vperm.slane %v756, 5
        %v938 = vperm.slane %v756, 6
        %v939 = vperm.slane %v756, 7
        %v940 = vperm.slane %v757, 0
        %v941 = vperm.slane %v757, 1
        %v942 = vperm.slane %v757, 2
        %v943 = vperm.slane %v757, 3
        %v944 = vperm.slane %v757, 4
        %v945 = vperm.slane %v757, 5
        %v946 = vperm.slane %v757, 6
        %v947 = vperm.slane %v757, 7
        %v948 = vperm.slane %v758, 0
        %v949 = vperm.slane %v758, 1
        %v950 = vperm.slane %v758, 2
        %v951 = vperm.slane %v758, 3
        %v952 = vperm.slane %v758, 4
        %v953 = vperm.slane %v758, 5
        %v954 = vperm.slane %v758, 6
        %v955 = vperm.slane %v758, 7
        %v956 = vperm.slane %v759, 0
        %v957 = vperm.slane %v759, 1
        %v958 = vperm.slane %v759, 2
        %v959 = vperm.slane %v759, 3
        %v960 = vperm.slane %v759, 4
        %v961 = vperm.slane %v759, 5
        %v962 = vperm.slane %v759, 6
        %v963 = vperm.slane %v759, 7
        %v964 = vperm.slane %v760, 0
        %v965 = vperm.slane %v760, 1
        %v966 = vperm.slane %v760, 2
        %v967 = vperm.slane %v760, 3
        %v968 = vperm.slane %v760, 4
        %v969 = vperm.slane %v760, 5
        %v970 = vperm.slane %v760, 6
        %v971 = vperm.slane %v760, 7
        %v972 = vperm.slane %v761, 0
        %v973 = vperm.slane %v761, 1
        %v974 = vperm.slane %v761, 2
        %v975 = vperm.slane %v761, 3
        %v976 = vperm.slane %v761, 4
        %v977 = vperm.slane %v761, 5
        %v978 = vperm.slane %v761, 6
        %v979 = vperm.slane %v761, 7
        %v980 = vperm.slane %v762, 0
        %v981 = vperm.slane %v762, 1
        %v982 = vperm.slane %v762, 2
        %v983 = vperm.slane %v762, 3
        %v984 = vperm.slane %v762, 4
        %v985 = vperm.slane %v762, 5
        %v986 = vperm.slane %v762, 6
        %v987 = vperm.slane %v762, 7
        %v988 = vperm.slane %v763, 0
        %v989 = vperm.slane %v763, 1
        %v990 = vperm.slane %v763, 2
        %v991 = vperm.slane %v763, 3
        %v992 = vperm.slane %v763, 4
        %v993 = vperm.slane %v763, 5
        %v994 = vperm.slane %v763, 6
        %v995 = vperm.slane %v763, 7
        %v996 = vperm.slane %v764, 0
        %v997 = vperm.slane %v764, 1
        %v998 = vperm.slane %v764, 2
        %v999 = vperm.slane %v764, 3
        %v1000 = vperm.slane %v764, 4
        %v1001 = vperm.slane %v764, 5
        %v1002 = vperm.slane %v764, 6
        %v1003 = vperm.slane %v764, 7
        %v1004 = vperm.slane %v765, 0
        %v1005 = vperm.slane %v765, 1
        %v1006 = vperm.slane %v765, 2
        %v1007 = vperm.slane %v765, 3
        %v1008 = vperm.slane %v765, 4
        %v1009 = vperm.slane %v765, 5
        %v1010 = vperm.slane %v765, 6
        %v1011 = vperm.slane %v765, 7
        %v1012 = vperm.slane %v766, 0
        %v1013 = vperm.slane %v766, 1
        %v1014 = vperm.slane %v766, 2
        %v1015 = vperm.slane %v766, 3
        %v1016 = vperm.slane %v766, 4
        %v1017 = vperm.slane %v766, 5
        %v1018 = vperm.slane %v766, 6
        %v1019 = vperm.slane %v766, 7
        %v1020 = vperm.slane %v767, 0
        %v1021 = vperm.slane %v767, 1
        %v1022 = vperm.slane %v767, 2
        %v1023 = vperm.slane %v767, 3
        %v1024 = vperm.slane %v767, 4
        %v1025 = vperm.slane %v767, 5
        %v1026 = vperm.slane %v767, 6
        %v1027 = vperm.slane %v767, 7
        %v1028 = vperm.slane %v768, 0
        %v1029 = vperm.slane %v768, 1
        %v1030 = vperm.slane %v768, 2
        %v1031 = vperm.slane %v768, 3
        %v1032 = vperm.slane %v768, 4
        %v1033 = vperm.slane %v768, 5
        %v1034 = vperm.slane %v768, 6
        %v1035 = vperm.slane %v768, 7
        %v1036 = vperm.slane %v769, 0
        %v1037 = vperm.slane %v769, 1
        %v1038 = vperm.slane %v769, 2
        %v1039 = vperm.slane %v769, 3
        %v1040 = vperm.slane %v769, 4
        %v1041 = vperm.slane %v769, 5
        %v1042 = vperm.slane %v769, 6
        %v1043 = vperm.slane %v769, 7
        %v1044 = vperm.slane %v770, 0
        %v1045 = vperm.slane %v770, 1
        %v1046 = vperm.slane %v770, 2
        %v1047 = vperm.slane %v770, 3
        %v1048 = vperm.slane %v770, 4
        %v1049 = vperm.slane %v770, 5
        %v1050 = vperm.slane %v770, 6
        %v1051 = vperm.slane %v770, 7
        %v1052 = vperm.slane %v771, 0
        %v1053 = vperm.slane %v771, 1
        %v1054 = vperm.slane %v771, 2
        %v1055 = vperm.slane %v771, 3
        %v1056 = vperm.slane %v771, 4
        %v1057 = vperm.slane %v771, 5
        %v1058 = vperm.slane %v771, 6
        %v1059 = vperm.slane %v771, 7
        %v1316 = vmul.f32 %v228, %v804
        %v1317 = vmul.f32 %v229, %v805
        %v1318 = vmul.f32 %v230, %v806
        %v1319 = vmul.f32 %v231, %v807
        %v1320 = vmul.f32 %v232, %v808
        %v1321 = vmul.f32 %v233, %v809
        %v1322 = vmul.f32 %v234, %v810
        %v1323 = vmul.f32 %v235, %v811
        %v1324 = vmul.f32 %v236, %v812
        %v1325 = vmul.f32 %v237, %v813
        %v1326 = vmul.f32 %v238, %v814
        %v1327 = vmul.f32 %v239, %v815
        %v1328 = vmul.f32 %v240, %v816
        %v1329 = vmul.f32 %v241, %v817
        %v1330 = vmul.f32 %v242, %v818
        %v1331 = vmul.f32 %v243, %v819
        %v1332 = vmul.f32 %v244, %v820
        %v1333 = vmul.f32 %v245, %v821
        %v1334 = vmul.f32 %v246, %v822
        %v1335 = vmul.f32 %v247, %v823
        %v1336 = vmul.f32 %v248, %v824
        %v1337 = vmul.f32 %v249, %v825
        %v1338 = vmul.f32 %v250, %v826
        %v1339 = vmul.f32 %v251, %v827
        %v1340 = vmul.f32 %v252, %v828
        %v1341 = vmul.f32 %v253, %v829
        %v1342 = vmul.f32 %v254, %v830
        %v1343 = vmul.f32 %v255, %v831
        %v1344 = vmul.f32 %v256, %v832
        %v1345 = vmul.f32 %v257, %v833
        %v1346 = vmul.f32 %v258, %v834
        %v1347 = vmul.f32 %v259, %v835
        %v1348 = vmul.f32 %v260, %v836
        %v1349 = vmul.f32 %v261, %v837
        %v1350 = vmul.f32 %v262, %v838
        %v1351 = vmul.f32 %v263, %v839
        %v1352 = vmul.f32 %v264, %v840
        %v1353 = vmul.f32 %v265, %v841
        %v1354 = vmul.f32 %v266, %v842
        %v1355 = vmul.f32 %v267, %v843
        %v1356 = vmul.f32 %v268, %v844
        %v1357 = vmul.f32 %v269, %v845
        %v1358 = vmul.f32 %v270, %v846
        %v1359 = vmul.f32 %v271, %v847
        %v1360 = vmul.f32 %v272, %v848
        %v1361 = vmul.f32 %v273, %v849
        %v1362 = vmul.f32 %v274, %v850
        %v1363 = vmul.f32 %v275, %v851
        %v1364 = vmul.f32 %v276, %v852
        %v1365 = vmul.f32 %v277, %v853
        %v1366 = vmul.f32 %v278, %v854
        %v1367 = vmul.f32 %v279, %v855
        %v1368 = vmul.f32 %v280, %v856
        %v1369 = vmul.f32 %v281, %v857
        %v1370 = vmul.f32 %v282, %v858
        %v1371 = vmul.f32 %v283, %v859
        %v1372 = vmul.f32 %v284, %v860
        %v1373 = vmul.f32 %v285, %v861
        %v1374 = vmul.f32 %v286, %v862
        %v1375 = vmul.f32 %v287, %v863
        %v1376 = vmul.f32 %v288, %v864
        %v1377 = vmul.f32 %v289, %v865
        %v1378 = vmul.f32 %v290, %v866
        %v1379 = vmul.f32 %v291, %v867
        %v1380 = vmul.f32 %v292, %v868
        %v1381 = vmul.f32 %v293, %v869
        %v1382 = vmul.f32 %v294, %v870
        %v1383 = vmul.f32 %v295, %v871
        %v1384 = vmul.f32 %v296, %v872
        %v1385 = vmul.f32 %v297, %v873
        %v1386 = vmul.f32 %v298, %v874
        %v1387 = vmul.f32 %v299, %v875
        %v1388 = vmul.f32 %v300, %v876
        %v1389 = vmul.f32 %v301, %v877
        %v1390 = vmul.f32 %v302, %v878
        %v1391 = vmul.f32 %v303, %v879
        %v1392 = vmul.f32 %v304, %v880
        %v1393 = vmul.f32 %v305, %v881
        %v1394 = vmul.f32 %v306, %v882
        %v1395 = vmul.f32 %v307, %v883
        %v1396 = vmul.f32 %v308, %v884
        %v1397 = vmul.f32 %v309, %v885
        %v1398 = vmul.f32 %v310, %v886
        %v1399 = vmul.f32 %v311, %v887
        %v1400 = vmul.f32 %v312, %v888
        %v1401 = vmul.f32 %v313, %v889
        %v1402 = vmul.f32 %v314, %v890
        %v1403 = vmul.f32 %v315, %v891
        %v1404 = vmul.f32 %v316, %v892
        %v1405 = vmul.f32 %v317, %v893
        %v1406 = vmul.f32 %v318, %v894
        %v1407 = vmul.f32 %v319, %v895
        %v1408 = vmul.f32 %v320, %v896
        %v1409 = vmul.f32 %v321, %v897
        %v1410 = vmul.f32 %v322, %v898
        %v1411 = vmul.f32 %v323, %v899
        %v1412 = vmul.f32 %v324, %v900
        %v1413 = vmul.f32 %v325, %v901
        %v1414 = vmul.f32 %v326, %v902
        %v1415 = vmul.f32 %v327, %v903
        %v1416 = vmul.f32 %v328, %v904
        %v1417 = vmul.f32 %v329, %v905
        %v1418 = vmul.f32 %v330, %v906
        %v1419 = vmul.f32 %v331, %v907
        %v1420 = vmul.f32 %v332, %v908
        %v1421 = vmul.f32 %v333, %v909
        %v1422 = vmul.f32 %v334, %v910
        %v1423 = vmul.f32 %v335, %v911
        %v1424 = vmul.f32 %v336, %v912
        %v1425 = vmul.f32 %v337, %v913
        %v1426 = vmul.f32 %v338, %v914
        %v1427 = vmul.f32 %v339, %v915
        %v1428 = vmul.f32 %v340, %v916
        %v1429 = vmul.f32 %v341, %v917
        %v1430 = vmul.f32 %v342, %v918
        %v1431 = vmul.f32 %v343, %v919
        %v1432 = vmul.f32 %v344, %v920
        %v1433 = vmul.f32 %v345, %v921
        %v1434 = vmul.f32 %v346, %v922
        %v1435 = vmul.f32 %v347, %v923
        %v1436 = vmul.f32 %v348, %v924
        %v1437 = vmul.f32 %v349, %v925
        %v1438 = vmul.f32 %v350, %v926
        %v1439 = vmul.f32 %v351, %v927
        %v1440 = vmul.f32 %v352, %v928
        %v1441 = vmul.f32 %v353, %v929
        %v1442 = vmul.f32 %v354, %v930
        %v1443 = vmul.f32 %v355, %v931
        %v1444 = vmul.f32 %v356, %v932
        %v1445 = vmul.f32 %v357, %v933
        %v1446 = vmul.f32 %v358, %v934
        %v1447 = vmul.f32 %v359, %v935
        %v1448 = vmul.f32 %v360, %v936
        %v1449 = vmul.f32 %v361, %v937
        %v1450 = vmul.f32 %v362, %v938
        %v1451 = vmul.f32 %v363, %v939
        %v1452 = vmul.f32 %v364, %v940
        %v1453 = vmul.f32 %v365, %v941
        %v1454 = vmul.f32 %v366, %v942
        %v1455 = vmul.f32 %v367, %v943
        %v1456 = vmul.f32 %v368, %v944
        %v1457 = vmul.f32 %v369, %v945
        %v1458 = vmul.f32 %v370, %v946
        %v1459 = vmul.f32 %v371, %v947
        %v1460 = vmul.f32 %v372, %v948
        %v1461 = vmul.f32 %v373, %v949
        %v1462 = vmul.f32 %v374, %v950
        %v1463 = vmul.f32 %v375, %v951
        %v1464 = vmul.f32 %v376, %v952
        %v1465 = vmul.f32 %v377, %v953
        %v1466 = vmul.f32 %v378, %v954
        %v1467 = vmul.f32 %v379, %v955
        %v1468 = vmul.f32 %v380, %v956
        %v1469 = vmul.f32 %v381, %v957
        %v1470 = vmul.f32 %v382, %v958
        %v1471 = vmul.f32 %v383, %v959
        %v1472 = vmul.f32 %v384, %v960
        %v1473 = vmul.f32 %v385, %v961
        %v1474 = vmul.f32 %v386, %v962
        %v1475 = vmul.f32 %v387, %v963
        %v1476 = vmul.f32 %v388, %v964
        %v1477 = vmul.f32 %v389, %v965
        %v1478 = vmul.f32 %v390, %v966
        %v1479 = vmul.f32 %v391, %v967
        %v1480 = vmul.f32 %v392, %v968
        %v1481 = vmul.f32 %v393, %v969
        %v1482 = vmul.f32 %v394, %v970
        %v1483 = vmul.f32 %v395, %v971
        %v1484 = vmul.f32 %v396, %v972
        %v1485 = vmul.f32 %v397, %v973
        %v1486 = vmul.f32 %v398, %v974
        %v1487 = vmul.f32 %v399, %v975
        %v1488 = vmul.f32 %v400, %v976
        %v1489 = vmul.f32 %v401, %v977
        %v1490 = vmul.f32 %v402, %v978
        %v1491 = vmul.f32 %v403, %v979
        %v1492 = vmul.f32 %v404, %v980
        %v1493 = vmul.f32 %v405, %v981
        %v1494 = vmul.f32 %v406, %v982
        %v1495 = vmul.f32 %v407, %v983
        %v1496 = vmul.f32 %v408, %v984
        %v1497 = vmul.f32 %v409, %v985
        %v1498 = vmul.f32 %v410, %v986
        %v1499 = vmul.f32 %v411, %v987
        %v1500 = vmul.f32 %v412, %v988
        %v1501 = vmul.f32 %v413, %v989
        %v1502 = vmul.f32 %v414, %v990
        %v1503 = vmul.f32 %v415, %v991
        %v1504 = vmul.f32 %v416, %v992
        %v1505 = vmul.f32 %v417, %v993
        %v1506 = vmul.f32 %v418, %v994
        %v1507 = vmul.f32 %v419, %v995
        %v1508 = vmul.f32 %v420, %v996
        %v1509 = vmul.f32 %v421, %v997
        %v1510 = vmul.f32 %v422, %v998
        %v1511 = vmul.f32 %v423, %v999
        %v1512 = vmul.f32 %v424, %v1000
        %v1513 = vmul.f32 %v425, %v1001
        %v1514 = vmul.f32 %v426, %v1002
        %v1515 = vmul.f32 %v427, %v1003
        %v1516 = vmul.f32 %v428, %v1004
        %v1517 = vmul.f32 %v429, %v1005
        %v1518 = vmul.f32 %v430, %v1006
        %v1519 = vmul.f32 %v431, %v1007
        %v1520 = vmul.f32 %v432, %v1008
        %v1521 = vmul.f32 %v433, %v1009
        %v1522 = vmul.f32 %v434, %v1010
        %v1523 = vmul.f32 %v435, %v1011
        %v1524 = vmul.f32 %v436, %v1012
        %v1525 = vmul.f32 %v437, %v1013
        %v1526 = vmul.f32 %v438, %v1014
        %v1527 = vmul.f32 %v439, %v1015
        %v1528 = vmul.f32 %v440, %v1016
        %v1529 = vmul.f32 %v441, %v1017
        %v1530 = vmul.f32 %v442, %v1018
        %v1531 = vmul.f32 %v443, %v1019
        %v1532 = vmul.f32 %v444, %v1020
        %v1533 = vmul.f32 %v445, %v1021
        %v1534 = vmul.f32 %v446, %v1022
        %v1535 = vmul.f32 %v447, %v1023
        %v1536 = vmul.f32 %v448, %v1024
        %v1537 = vmul.f32 %v449, %v1025
        %v1538 = vmul.f32 %v450, %v1026
        %v1539 = vmul.f32 %v451, %v1027
        %v1540 = vmul.f32 %v452, %v1028
        %v1541 = vmul.f32 %v453, %v1029
        %v1542 = vmul.f32 %v454, %v1030
        %v1543 = vmul.f32 %v455, %v1031
        %v1544 = vmul.f32 %v456, %v1032
        %v1545 = vmul.f32 %v457, %v1033
        %v1546 = vmul.f32 %v458, %v1034
        %v1547 = vmul.f32 %v459, %v1035
        %v1548 = vmul.f32 %v460, %v1036
        %v1549 = vmul.f32 %v461, %v1037
        %v1550 = vmul.f32 %v462, %v1038
        %v1551 = vmul.f32 %v463, %v1039
        %v1552 = vmul.f32 %v464, %v1040
        %v1553 = vmul.f32 %v465, %v1041
        %v1554 = vmul.f32 %v466, %v1042
        %v1555 = vmul.f32 %v467, %v1043
        %v1556 = vmul.f32 %v468, %v1044
        %v1557 = vmul.f32 %v469, %v1045
        %v1558 = vmul.f32 %v470, %v1046
        %v1559 = vmul.f32 %v471, %v1047
        %v1560 = vmul.f32 %v472, %v1048
        %v1561 = vmul.f32 %v473, %v1049
        %v1562 = vmul.f32 %v474, %v1050
        %v1563 = vmul.f32 %v475, %v1051
        %v1564 = vmul.f32 %v476, %v1052
        %v1565 = vmul.f32 %v477, %v1053
        %v1566 = vmul.f32 %v478, %v1054
        %v1567 = vmul.f32 %v479, %v1055
        %v1568 = vmul.f32 %v480, %v1056
        %v1569 = vmul.f32 %v481, %v1057
        %v1570 = vmul.f32 %v482, %v1058
        %v1571 = vmul.f32 %v483, %v1059
        %v1572 = vmul.f32 %v484, %v804
        %v1573 = vmul.f32 %v485, %v805
        %v1574 = vmul.f32 %v486, %v806
        %v1575 = vmul.f32 %v487, %v807
        %v1576 = vmul.f32 %v488, %v808
        %v1577 = vmul.f32 %v489, %v809
        %v1578 = vmul.f32 %v490, %v810
        %v1579 = vmul.f32 %v491, %v811
        %v1580 = vmul.f32 %v492, %v812
        %v1581 = vmul.f32 %v493, %v813
        %v1582 = vmul.f32 %v494, %v814
        %v1583 = vmul.f32 %v495, %v815
        %v1584 = vmul.f32 %v496, %v816
        %v1585 = vmul.f32 %v497, %v817
        %v1586 = vmul.f32 %v498, %v818
        %v1587 = vmul.f32 %v499, %v819
        %v1588 = vmul.f32 %v500, %v820
        %v1589 = vmul.f32 %v501, %v821
        %v1590 = vmul.f32 %v502, %v822
        %v1591 = vmul.f32 %v503, %v823
        %v1592 = vmul.f32 %v504, %v824
        %v1593 = vmul.f32 %v505, %v825
        %v1594 = vmul.f32 %v506, %v826
        %v1595 = vmul.f32 %v507, %v827
        %v1596 = vmul.f32 %v508, %v828
        %v1597 = vmul.f32 %v509, %v829
        %v1598 = vmul.f32 %v510, %v830
        %v1599 = vmul.f32 %v511, %v831
        %v1600 = vmul.f32 %v512, %v832
        %v1601 = vmul.f32 %v513, %v833
        %v1602 = vmul.f32 %v514, %v834
        %v1603 = vmul.f32 %v515, %v835
        %v1604 = vmul.f32 %v516, %v836
        %v1605 = vmul.f32 %v517, %v837
        %v1606 = vmul.f32 %v518, %v838
        %v1607 = vmul.f32 %v519, %v839
        %v1608 = vmul.f32 %v520, %v840
        %v1609 = vmul.f32 %v521, %v841
        %v1610 = vmul.f32 %v522, %v842
        %v1611 = vmul.f32 %v523, %v843
        %v1612 = vmul.f32 %v524, %v844
        %v1613 = vmul.f32 %v525, %v845
        %v1614 = vmul.f32 %v526, %v846
        %v1615 = vmul.f32 %v527, %v847
        %v1616 = vmul.f32 %v528, %v848
        %v1617 = vmul.f32 %v529, %v849
        %v1618 = vmul.f32 %v530, %v850
        %v1619 = vmul.f32 %v531, %v851
        %v1620 = vmul.f32 %v532, %v852
        %v1621 = vmul.f32 %v533, %v853
        %v1622 = vmul.f32 %v534, %v854
        %v1623 = vmul.f32 %v535, %v855
        %v1624 = vmul.f32 %v536, %v856
        %v1625 = vmul.f32 %v537, %v857
        %v1626 = vmul.f32 %v538, %v858
        %v1627 = vmul.f32 %v539, %v859
        %v1628 = vmul.f32 %v540, %v860
        %v1629 = vmul.f32 %v541, %v861
        %v1630 = vmul.f32 %v542, %v862
        %v1631 = vmul.f32 %v543, %v863
        %v1632 = vmul.f32 %v544, %v864
        %v1633 = vmul.f32 %v545, %v865
        %v1634 = vmul.f32 %v546, %v866
        %v1635 = vmul.f32 %v547, %v867
        %v1636 = vmul.f32 %v548, %v868
        %v1637 = vmul.f32 %v549, %v869
        %v1638 = vmul.f32 %v550, %v870
        %v1639 = vmul.f32 %v551, %v871
        %v1640 = vmul.f32 %v552, %v872
        %v1641 = vmul.f32 %v553, %v873
        %v1642 = vmul.f32 %v554, %v874
        %v1643 = vmul.f32 %v555, %v875
        %v1644 = vmul.f32 %v556, %v876
        %v1645 = vmul.f32 %v557, %v877
        %v1646 = vmul.f32 %v558, %v878
        %v1647 = vmul.f32 %v559, %v879
        %v1648 = vmul.f32 %v560, %v880
        %v1649 = vmul.f32 %v561, %v881
        %v1650 = vmul.f32 %v562, %v882
        %v1651 = vmul.f32 %v563, %v883
        %v1652 = vmul.f32 %v564, %v884
        %v1653 = vmul.f32 %v565, %v885
        %v1654 = vmul.f32 %v566, %v886
        %v1655 = vmul.f32 %v567, %v887
        %v1656 = vmul.f32 %v568, %v888
        %v1657 = vmul.f32 %v569, %v889
        %v1658 = vmul.f32 %v570, %v890
        %v1659 = vmul.f32 %v571, %v891
        %v1660 = vmul.f32 %v572, %v892
        %v1661 = vmul.f32 %v573, %v893
        %v1662 = vmul.f32 %v574, %v894
        %v1663 = vmul.f32 %v575, %v895
        %v1664 = vmul.f32 %v576, %v896
        %v1665 = vmul.f32 %v577, %v897
        %v1666 = vmul.f32 %v578, %v898
        %v1667 = vmul.f32 %v579, %v899
        %v1668 = vmul.f32 %v580, %v900
        %v1669 = vmul.f32 %v581, %v901
        %v1670 = vmul.f32 %v582, %v902
        %v1671 = vmul.f32 %v583, %v903
        %v1672 = vmul.f32 %v584, %v904
        %v1673 = vmul.f32 %v585, %v905
        %v1674 = vmul.f32 %v586, %v906
        %v1675 = vmul.f32 %v587, %v907
        %v1676 = vmul.f32 %v588, %v908
        %v1677 = vmul.f32 %v589, %v909
        %v1678 = vmul.f32 %v590, %v910
        %v1679 = vmul.f32 %v591, %v911
        %v1680 = vmul.f32 %v592, %v912
        %v1681 = vmul.f32 %v593, %v913
        %v1682 = vmul.f32 %v594, %v914
        %v1683 = vmul.f32 %v595, %v915
        %v1684 = vmul.f32 %v596, %v916
        %v1685 = vmul.f32 %v597, %v917
        %v1686 = vmul.f32 %v598, %v918
        %v1687 = vmul.f32 %v599, %v919
        %v1688 = vmul.f32 %v600, %v920
        %v1689 = vmul.f32 %v601, %v921
        %v1690 = vmul.f32 %v602, %v922
        %v1691 = vmul.f32 %v603, %v923
        %v1692 = vmul.f32 %v604, %v924
        %v1693 = vmul.f32 %v605, %v925
        %v1694 = vmul.f32 %v606, %v926
        %v1695 = vmul.f32 %v607, %v927
        %v1696 = vmul.f32 %v608, %v928
        %v1697 = vmul.f32 %v609, %v929
        %v1698 = vmul.f32 %v610, %v930
        %v1699 = vmul.f32 %v611, %v931
        %v1700 = vmul.f32 %v612, %v932
        %v1701 = vmul.f32 %v613, %v933
        %v1702 = vmul.f32 %v614, %v934
        %v1703 = vmul.f32 %v615, %v935
        %v1704 = vmul.f32 %v616, %v936
        %v1705 = vmul.f32 %v617, %v937
        %v1706 = vmul.f32 %v618, %v938
        %v1707 = vmul.f32 %v619, %v939
        %v1708 = vmul.f32 %v620, %v940
        %v1709 = vmul.f32 %v621, %v941
        %v1710 = vmul.f32 %v622, %v942
        %v1711 = vmul.f32 %v623, %v943
        %v1712 = vmul.f32 %v624, %v944
        %v1713 = vmul.f32 %v625, %v945
        %v1714 = vmul.f32 %v626, %v946
        %v1715 = vmul.f32 %v627, %v947
        %v1716 = vmul.f32 %v628, %v948
        %v1717 = vmul.f32 %v629, %v949
        %v1718 = vmul.f32 %v630, %v950
        %v1719 = vmul.f32 %v631, %v951
        %v1720 = vmul.f32 %v632, %v952
        %v1721 = vmul.f32 %v633, %v953
        %v1722 = vmul.f32 %v634, %v954
        %v1723 = vmul.f32 %v635, %v955
        %v1724 = vmul.f32 %v636, %v956
        %v1725 = vmul.f32 %v637, %v957
        %v1726 = vmul.f32 %v638, %v958
        %v1727 = vmul.f32 %v639, %v959
        %v1728 = vmul.f32 %v640, %v960
        %v1729 = vmul.f32 %v641, %v961
        %v1730 = vmul.f32 %v642, %v962
        %v1731 = vmul.f32 %v643, %v963
        %v1732 = vmul.f32 %v644, %v964
        %v1733 = vmul.f32 %v645, %v965
        %v1734 = vmul.f32 %v646, %v966
        %v1735 = vmul.f32 %v647, %v967
        %v1736 = vmul.f32 %v648, %v968
        %v1737 = vmul.f32 %v649, %v969
        %v1738 = vmul.f32 %v650, %v970
        %v1739 = vmul.f32 %v651, %v971
        %v1740 = vmul.f32 %v652, %v972
        %v1741 = vmul.f32 %v653, %v973
        %v1742 = vmul.f32 %v654, %v974
        %v1743 = vmul.f32 %v655, %v975
        %v1744 = vmul.f32 %v656, %v976
        %v1745 = vmul.f32 %v657, %v977
        %v1746 = vmul.f32 %v658, %v978
        %v1747 = vmul.f32 %v659, %v979
        %v1748 = vmul.f32 %v660, %v980
        %v1749 = vmul.f32 %v661, %v981
        %v1750 = vmul.f32 %v662, %v982
        %v1751 = vmul.f32 %v663, %v983
        %v1752 = vmul.f32 %v664, %v984
        %v1753 = vmul.f32 %v665, %v985
        %v1754 = vmul.f32 %v666, %v986
        %v1755 = vmul.f32 %v667, %v987
        %v1756 = vmul.f32 %v668, %v988
        %v1757 = vmul.f32 %v669, %v989
        %v1758 = vmul.f32 %v670, %v990
        %v1759 = vmul.f32 %v671, %v991
        %v1760 = vmul.f32 %v672, %v992
        %v1761 = vmul.f32 %v673, %v993
        %v1762 = vmul.f32 %v674, %v994
        %v1763 = vmul.f32 %v675, %v995
        %v1764 = vmul.f32 %v676, %v996
        %v1765 = vmul.f32 %v677, %v997
        %v1766 = vmul.f32 %v678, %v998
        %v1767 = vmul.f32 %v679, %v999
        %v1768 = vmul.f32 %v680, %v1000
        %v1769 = vmul.f32 %v681, %v1001
        %v1770 = vmul.f32 %v682, %v1002
        %v1771 = vmul.f32 %v683, %v1003
        %v1772 = vmul.f32 %v684, %v1004
        %v1773 = vmul.f32 %v685, %v1005
        %v1774 = vmul.f32 %v686, %v1006
        %v1775 = vmul.f32 %v687, %v1007
        %v1776 = vmul.f32 %v688, %v1008
        %v1777 = vmul.f32 %v689, %v1009
        %v1778 = vmul.f32 %v690, %v1010
        %v1779 = vmul.f32 %v691, %v1011
        %v1780 = vmul.f32 %v692, %v1012
        %v1781 = vmul.f32 %v693, %v1013
        %v1782 = vmul.f32 %v694, %v1014
        %v1783 = vmul.f32 %v695, %v1015
        %v1784 = vmul.f32 %v696, %v1016
        %v1785 = vmul.f32 %v697, %v1017
        %v1786 = vmul.f32 %v698, %v1018
        %v1787 = vmul.f32 %v699, %v1019
        %v1788 = vmul.f32 %v700, %v1020
        %v1789 = vmul.f32 %v701, %v1021
        %v1790 = vmul.f32 %v702, %v1022
        %v1791 = vmul.f32 %v703, %v1023
        %v1792 = vmul.f32 %v704, %v1024
        %v1793 = vmul.f32 %v705, %v1025
        %v1794 = vmul.f32 %v706, %v1026
        %v1795 = vmul.f32 %v707, %v1027
        %v1796 = vmul.f32 %v708, %v1028
        %v1797 = vmul.f32 %v709, %v1029
        %v1798 = vmul.f32 %v710, %v1030
        %v1799 = vmul.f32 %v711, %v1031
        %v1800 = vmul.f32 %v712, %v1032
        %v1801 = vmul.f32 %v713, %v1033
        %v1802 = vmul.f32 %v714, %v1034
        %v1803 = vmul.f32 %v715, %v1035
        %v1804 = vmul.f32 %v716, %v1036
        %v1805 = vmul.f32 %v717, %v1037
        %v1806 = vmul.f32 %v718, %v1038
        %v1807 = vmul.f32 %v719, %v1039
        %v1808 = vmul.f32 %v720, %v1040
        %v1809 = vmul.f32 %v721, %v1041
        %v1810 = vmul.f32 %v722, %v1042
        %v1811 = vmul.f32 %v723, %v1043
        %v1812 = vmul.f32 %v724, %v1044
        %v1813 = vmul.f32 %v725, %v1045
        %v1814 = vmul.f32 %v726, %v1046
        %v1815 = vmul.f32 %v727, %v1047
        %v1816 = vmul.f32 %v728, %v1048
        %v1817 = vmul.f32 %v729, %v1049
        %v1818 = vmul.f32 %v730, %v1050
        %v1819 = vmul.f32 %v731, %v1051
        %v1820 = vmul.f32 %v732, %v1052
        %v1821 = vmul.f32 %v733, %v1053
        %v1822 = vmul.f32 %v734, %v1054
        %v1823 = vmul.f32 %v735, %v1055
        %v1824 = vmul.f32 %v736, %v1056
        %v1825 = vmul.f32 %v737, %v1057
        %v1826 = vmul.f32 %v738, %v1058
        %v1827 = vmul.f32 %v739, %v1059
        %v1828 = vld [vmem:[#allocation2] sm:$0xff]
        %v1829 = vld [vmem:[#allocation2 + $0x8] sm:$0x3]
        %v1830 = vadd.f32 %v1316, %v1317
        %v1831 = vadd.f32 %v1830, %v1318
        %v1832 = vadd.f32 %v1831, %v1319
        %v1833 = vadd.f32 %v1832, %v1320
        %v1834 = vadd.f32 %v1833, %v1321
        %v1835 = vadd.f32 %v1834, %v1322
        %v1836 = vadd.f32 %v1835, %v1323
        %v1837 = vadd.f32 %v1836, %v1324
        %v1838 = vadd.f32 %v1837, %v1325
        %v1839 = vadd.f32 %v1838, %v1326
        %v1840 = vadd.f32 %v1839, %v1327
        %v1841 = vadd.f32 %v1840, %v1328
        %v1842 = vadd.f32 %v1841, %v1329
        %v1843 = vadd.f32 %v1842, %v1330
        %v1844 = vadd.f32 %v1843, %v1331
        %v1845 = vadd.f32 %v1844, %v1332
        %v1846 = vadd.f32 %v1845, %v1333
        %v1847 = vadd.f32 %v1846, %v1334
        %v1848 = vadd.f32 %v1847, %v1335
        %v1849 = vadd.f32 %v1848, %v1336
        %v1850 = vadd.f32 %v1849, %v1337
        %v1851 = vadd.f32 %v1850, %v1338
        %v1852 = vadd.f32 %v1851, %v1339
        %v1853 = vadd.f32 %v1852, %v1340
        %v1854 = vadd.f32 %v1853, %v1341
        %v1855 = vadd.f32 %v1854, %v1342
        %v1856 = vadd.f32 %v1855, %v1343
        %v1857 = vadd.f32 %v1856, %v1344
        %v1858 = vadd.f32 %v1857, %v1345
        %v1859 = vadd.f32 %v1858, %v1346
        %v1860 = vadd.f32 %v1859, %v1347
        %v1861 = vadd.f32 %v1860, %v1348
        %v1862 = vadd.f32 %v1861, %v1349
        %v1863 = vadd.f32 %v1862, %v1350
        %v1864 = vadd.f32 %v1863, %v1351
        %v1865 = vadd.f32 %v1864, %v1352
        %v1866 = vadd.f32 %v1865, %v1353
        %v1867 = vadd.f32 %v1866, %v1354
        %v1868 = vadd.f32 %v1867, %v1355
        %v1869 = vadd.f32 %v1868, %v1356
        %v1870 = vadd.f32 %v1869, %v1357
        %v1871 = vadd.f32 %v1870, %v1358
        %v1872 = vadd.f32 %v1871, %v1359
        %v1873 = vadd.f32 %v1872, %v1360
        %v1874 = vadd.f32 %v1873, %v1361
        %v1875 = vadd.f32 %v1874, %v1362
        %v1876 = vadd.f32 %v1875, %v1363
        %v1877 = vadd.f32 %v1876, %v1364
        %v1878 = vadd.f32 %v1877, %v1365
        %v1879 = vadd.f32 %v1878, %v1366
        %v1880 = vadd.f32 %v1879, %v1367
        %v1881 = vadd.f32 %v1880, %v1368
        %v1882 = vadd.f32 %v1881, %v1369
        %v1883 = vadd.f32 %v1882, %v1370
        %v1884 = vadd.f32 %v1883, %v1371
        %v1885 = vadd.f32 %v1884, %v1372
        %v1886 = vadd.f32 %v1885, %v1373
        %v1887 = vadd.f32 %v1886, %v1374
        %v1888 = vadd.f32 %v1887, %v1375
        %v1889 = vadd.f32 %v1888, %v1376
        %v1890 = vadd.f32 %v1889, %v1377
        %v1891 = vadd.f32 %v1890, %v1378
        %v1892 = vadd.f32 %v1891, %v1379
        %v1893 = vadd.f32 %v1892, %v1380
        %v1894 = vadd.f32 %v1893, %v1381
        %v1895 = vadd.f32 %v1894, %v1382
        %v1896 = vadd.f32 %v1895, %v1383
        %v1897 = vadd.f32 %v1896, %v1384
        %v1898 = vadd.f32 %v1897, %v1385
        %v1899 = vadd.f32 %v1898, %v1386
        %v1900 = vadd.f32 %v1899, %v1387
        %v1901 = vadd.f32 %v1900, %v1388
        %v1902 = vadd.f32 %v1901, %v1389
        %v1903 = vadd.f32 %v1902, %v1390
        %v1904 = vadd.f32 %v1903, %v1391
        %v1905 = vadd.f32 %v1904, %v1392
        %v1906 = vadd.f32 %v1905, %v1393
        %v1907 = vadd.f32 %v1906, %v1394
        %v1908 = vadd.f32 %v1907, %v1395
        %v1909 = vadd.f32 %v1908, %v1396
        %v1910 = vadd.f32 %v1909, %v1397
        %v1911 = vadd.f32 %v1910, %v1398
        %v1912 = vadd.f32 %v1911, %v1399
        %v1913 = vadd.f32 %v1912, %v1400
        %v1914 = vadd.f32 %v1913, %v1401
        %v1915 = vadd.f32 %v1914, %v1402
        %v1916 = vadd.f32 %v1915, %v1403
        %v1917 = vadd.f32 %v1916, %v1404
        %v1918 = vadd.f32 %v1917, %v1405
        %v1919 = vadd.f32 %v1918, %v1406
        %v1920 = vadd.f32 %v1919, %v1407
        %v1921 = vadd.f32 %v1920, %v1408
        %v1922 = vadd.f32 %v1921, %v1409
        %v1923 = vadd.f32 %v1922, %v1410
        %v1924 = vadd.f32 %v1923, %v1411
        %v1925 = vadd.f32 %v1924, %v1412
        %v1926 = vadd.f32 %v1925, %v1413
        %v1927 = vadd.f32 %v1926, %v1414
        %v1928 = vadd.f32 %v1927, %v1415
        %v1929 = vadd.f32 %v1928, %v1416
        %v1930 = vadd.f32 %v1929, %v1417
        %v1931 = vadd.f32 %v1930, %v1418
        %v1932 = vadd.f32 %v1931, %v1419
        %v1933 = vadd.f32 %v1932, %v1420
        %v1934 = vadd.f32 %v1933, %v1421
        %v1935 = vadd.f32 %v1934, %v1422
        %v1936 = vadd.f32 %v1935, %v1423
        %v1937 = vadd.f32 %v1936, %v1424
        %v1938 = vadd.f32 %v1937, %v1425
        %v1939 = vadd.f32 %v1938, %v1426
        %v1940 = vadd.f32 %v1939, %v1427
        %v1941 = vadd.f32 %v1940, %v1428
        %v1942 = vadd.f32 %v1941, %v1429
        %v1943 = vadd.f32 %v1942, %v1430
        %v1944 = vadd.f32 %v1943, %v1431
        %v1945 = vadd.f32 %v1944, %v1432
        %v1946 = vadd.f32 %v1945, %v1433
        %v1947 = vadd.f32 %v1946, %v1434
        %v1948 = vadd.f32 %v1947, %v1435
        %v1949 = vadd.f32 %v1948, %v1436
        %v1950 = vadd.f32 %v1949, %v1437
        %v1951 = vadd.f32 %v1950, %v1438
        %v1952 = vadd.f32 %v1951, %v1439
        %v1953 = vadd.f32 %v1952, %v1440
        %v1954 = vadd.f32 %v1953, %v1441
        %v1955 = vadd.f32 %v1954, %v1442
        %v1956 = vadd.f32 %v1955, %v1443
        %v1957 = vadd.f32 %v1956, %v1444
        %v1958 = vadd.f32 %v1957, %v1445
        %v1959 = vadd.f32 %v1958, %v1446
        %v1960 = vadd.f32 %v1959, %v1447
        %v1961 = vadd.f32 %v1960, %v1448
        %v1962 = vadd.f32 %v1961, %v1449
        %v1963 = vadd.f32 %v1962, %v1450
        %v1964 = vadd.f32 %v1963, %v1451
        %v1965 = vadd.f32 %v1964, %v1452
        %v1966 = vadd.f32 %v1965, %v1453
        %v1967 = vadd.f32 %v1966, %v1454
        %v1968 = vadd.f32 %v1967, %v1455
        %v1969 = vadd.f32 %v1968, %v1456
        %v1970 = vadd.f32 %v1969, %v1457
        %v1971 = vadd.f32 %v1970, %v1458
        %v1972 = vadd.f32 %v1971, %v1459
        %v1973 = vadd.f32 %v1972, %v1460
        %v1974 = vadd.f32 %v1973, %v1461
        %v1975 = vadd.f32 %v1974, %v1462
        %v1976 = vadd.f32 %v1975, %v1463
        %v1977 = vadd.f32 %v1976, %v1464
        %v1978 = vadd.f32 %v1977, %v1465
        %v1979 = vadd.f32 %v1978, %v1466
        %v1980 = vadd.f32 %v1979, %v1467
        %v1981 = vadd.f32 %v1980, %v1468
        %v1982 = vadd.f32 %v1981, %v1469
        %v1983 = vadd.f32 %v1982, %v1470
        %v1984 = vadd.f32 %v1983, %v1471
        %v1985 = vadd.f32 %v1984, %v1472
        %v1986 = vadd.f32 %v1985, %v1473
        %v1987 = vadd.f32 %v1986, %v1474
        %v1988 = vadd.f32 %v1987, %v1475
        %v1989 = vadd.f32 %v1988, %v1476
        %v1990 = vadd.f32 %v1989, %v1477
        %v1991 = vadd.f32 %v1990, %v1478
        %v1992 = vadd.f32 %v1991, %v1479
        %v1993 = vadd.f32 %v1992, %v1480
        %v1994 = vadd.f32 %v1993, %v1481
        %v1995 = vadd.f32 %v1994, %v1482
        %v1996 = vadd.f32 %v1995, %v1483
        %v1997 = vadd.f32 %v1996, %v1484
        %v1998 = vadd.f32 %v1997, %v1485
        %v1999 = vadd.f32 %v1998, %v1486
        %v2000 = vadd.f32 %v1999, %v1487
        %v2001 = vadd.f32 %v2000, %v1488
        %v2002 = vadd.f32 %v2001, %v1489
        %v2003 = vadd.f32 %v2002, %v1490
        %v2004 = vadd.f32 %v2003, %v1491
        %v2005 = vadd.f32 %v2004, %v1492
        %v2006 = vadd.f32 %v2005, %v1493
        %v2007 = vadd.f32 %v2006, %v1494
        %v2008 = vadd.f32 %v2007, %v1495
        %v2009 = vadd.f32 %v2008, %v1496
        %v2010 = vadd.f32 %v2009, %v1497
        %v2011 = vadd.f32 %v2010, %v1498
        %v2012 = vadd.f32 %v2011, %v1499
        %v2013 = vadd.f32 %v2012, %v1500
        %v2014 = vadd.f32 %v2013, %v1501
        %v2015 = vadd.f32 %v2014, %v1502
        %v2016 = vadd.f32 %v2015, %v1503
        %v2017 = vadd.f32 %v2016, %v1504
        %v2018 = vadd.f32 %v2017, %v1505
        %v2019 = vadd.f32 %v2018, %v1506
        %v2020 = vadd.f32 %v2019, %v1507
        %v2021 = vadd.f32 %v2020, %v1508
        %v2022 = vadd.f32 %v2021, %v1509
        %v2023 = vadd.f32 %v2022, %v1510
        %v2024 = vadd.f32 %v2023, %v1511
        %v2025 = vadd.f32 %v2024, %v1512
        %v2026 = vadd.f32 %v2025, %v1513
        %v2027 = vadd.f32 %v2026, %v1514
        %v2028 = vadd.f32 %v2027, %v1515
        %v2029 = vadd.f32 %v2028, %v1516
        %v2030 = vadd.f32 %v2029, %v1517
        %v2031 = vadd.f32 %v2030, %v1518
        %v2032 = vadd.f32 %v2031, %v1519
        %v2033 = vadd.f32 %v2032, %v1520
        %v2034 = vadd.f32 %v2033, %v1521
        %v2035 = vadd.f32 %v2034, %v1522
        %v2036 = vadd.f32 %v2035, %v1523
        %v2037 = vadd.f32 %v2036, %v1524
        %v2038 = vadd.f32 %v2037, %v1525
        %v2039 = vadd.f32 %v2038, %v1526
        %v2040 = vadd.f32 %v2039, %v1527
        %v2041 = vadd.f32 %v2040, %v1528
        %v2042 = vadd.f32 %v2041, %v1529
        %v2043 = vadd.f32 %v2042, %v1530
        %v2044 = vadd.f32 %v2043, %v1531
        %v2045 = vadd.f32 %v2044, %v1532
        %v2046 = vadd.f32 %v2045, %v1533
        %v2047 = vadd.f32 %v2046, %v1534
        %v2048 = vadd.f32 %v2047, %v1535
        %v2049 = vadd.f32 %v2048, %v1536
        %v2050 = vadd.f32 %v2049, %v1537
        %v2051 = vadd.f32 %v2050, %v1538
        %v2052 = vadd.f32 %v2051, %v1539
        %v2053 = vadd.f32 %v2052, %v1540
        %v2054 = vadd.f32 %v2053, %v1541
        %v2055 = vadd.f32 %v2054, %v1542
        %v2056 = vadd.f32 %v2055, %v1543
        %v2057 = vadd.f32 %v2056, %v1544
        %v2058 = vadd.f32 %v2057, %v1545
        %v2059 = vadd.f32 %v2058, %v1546
        %v2060 = vadd.f32 %v2059, %v1547
        %v2061 = vadd.f32 %v2060, %v1548
        %v2062 = vadd.f32 %v2061, %v1549
        %v2063 = vadd.f32 %v2062, %v1550
        %v2064 = vadd.f32 %v2063, %v1551
        %v2065 = vadd.f32 %v2064, %v1552
        %v2066 = vadd.f32 %v2065, %v1553
        %v2067 = vadd.f32 %v2066, %v1554
        %v2068 = vadd.f32 %v2067, %v1555
        %v2069 = vadd.f32 %v2068, %v1556
        %v2070 = vadd.f32 %v2069, %v1557
        %v2071 = vadd.f32 %v2070, %v1558
        %v2072 = vadd.f32 %v2071, %v1559
        %v2073 = vadd.f32 %v2072, %v1560
        %v2074 = vadd.f32 %v2073, %v1561
        %v2075 = vadd.f32 %v2074, %v1562
        %v2076 = vadd.f32 %v2075, %v1563
        %v2077 = vadd.f32 %v2076, %v1564
        %v2078 = vadd.f32 %v2077, %v1565
        %v2079 = vadd.f32 %v2078, %v1566
        %v2080 = vadd.f32 %v2079, %v1567
        %v2081 = vadd.f32 %v2080, %v1568
        %v2082 = vadd.f32 %v2081, %v1569
        %v2083 = vadd.f32 %v2082, %v1570
        %v2084 = vadd.f32 %v2083, %v1571
        %2085 = vadd.xlane.f32.xlu0 %v2084
        %v2086 = vpop.xlane.xlu0 %2085
        %vm2087 = vcmask 1041408
        %v2088 = vsel %vm2087, %v1572, 0.0
        %v2089 = vsel %vm2087, %v1573, 0.0
        %v2090 = vadd.f32 %v2088, %v2089
        %v2091 = vsel %vm2087, %v1574, 0.0
        %v2092 = vadd.f32 %v2090, %v2091
        %v2093 = vsel %vm2087, %v1575, 0.0
        %v2094 = vadd.f32 %v2092, %v2093
        %v2095 = vsel %vm2087, %v1576, 0.0
        %v2096 = vadd.f32 %v2094, %v2095
        %v2097 = vsel %vm2087, %v1577, 0.0
        %v2098 = vadd.f32 %v2096, %v2097
        %v2099 = vsel %vm2087, %v1578, 0.0
        %v2100 = vadd.f32 %v2098, %v2099
        %v2101 = vsel %vm2087, %v1579, 0.0
        %v2102 = vadd.f32 %v2100, %v2101
        %v2103 = vsel %vm2087, %v1580, 0.0
        %v2104 = vadd.f32 %v2102, %v2103
        %v2105 = vsel %vm2087, %v1581, 0.0
        %v2106 = vadd.f32 %v2104, %v2105
        %v2107 = vsel %vm2087, %v1582, 0.0
        %v2108 = vadd.f32 %v2106, %v2107
        %v2109 = vsel %vm2087, %v1583, 0.0
        %v2110 = vadd.f32 %v2108, %v2109
        %v2111 = vsel %vm2087, %v1584, 0.0
        %v2112 = vadd.f32 %v2110, %v2111
        %v2113 = vsel %vm2087, %v1585, 0.0
        %v2114 = vadd.f32 %v2112, %v2113
        %v2115 = vsel %vm2087, %v1586, 0.0
        %v2116 = vadd.f32 %v2114, %v2115
        %v2117 = vsel %vm2087, %v1587, 0.0
        %v2118 = vadd.f32 %v2116, %v2117
        %v2119 = vsel %vm2087, %v1588, 0.0
        %v2120 = vadd.f32 %v2118, %v2119
        %v2121 = vsel %vm2087, %v1589, 0.0
        %v2122 = vadd.f32 %v2120, %v2121
        %v2123 = vsel %vm2087, %v1590, 0.0
        %v2124 = vadd.f32 %v2122, %v2123
        %v2125 = vsel %vm2087, %v1591, 0.0
        %v2126 = vadd.f32 %v2124, %v2125
        %v2127 = vsel %vm2087, %v1592, 0.0
        %v2128 = vadd.f32 %v2126, %v2127
        %v2129 = vsel %vm2087, %v1593, 0.0
        %v2130 = vadd.f32 %v2128, %v2129
        %v2131 = vsel %vm2087, %v1594, 0.0
        %v2132 = vadd.f32 %v2130, %v2131
        %v2133 = vsel %vm2087, %v1595, 0.0
        %v2134 = vadd.f32 %v2132, %v2133
        %v2135 = vsel %vm2087, %v1596, 0.0
        %v2136 = vadd.f32 %v2134, %v2135
        %v2137 = vsel %vm2087, %v1597, 0.0
        %v2138 = vadd.f32 %v2136, %v2137
        %v2139 = vsel %vm2087, %v1598, 0.0
        %v2140 = vadd.f32 %v2138, %v2139
        %v2141 = vsel %vm2087, %v1599, 0.0
        %v2142 = vadd.f32 %v2140, %v2141
        %v2143 = vsel %vm2087, %v1600, 0.0
        %v2144 = vadd.f32 %v2142, %v2143
        %v2145 = vsel %vm2087, %v1601, 0.0
        %v2146 = vadd.f32 %v2144, %v2145
        %v2147 = vsel %vm2087, %v1602, 0.0
        %v2148 = vadd.f32 %v2146, %v2147
        %v2149 = vsel %vm2087, %v1603, 0.0
        %v2150 = vadd.f32 %v2148, %v2149
        %v2151 = vsel %vm2087, %v1604, 0.0
        %v2152 = vadd.f32 %v2150, %v2151
        %v2153 = vsel %vm2087, %v1605, 0.0
        %v2154 = vadd.f32 %v2152, %v2153
        %v2155 = vsel %vm2087, %v1606, 0.0
        %v2156 = vadd.f32 %v2154, %v2155
        %v2157 = vsel %vm2087, %v1607, 0.0
        %v2158 = vadd.f32 %v2156, %v2157
        %v2159 = vsel %vm2087, %v1608, 0.0
        %v2160 = vadd.f32 %v2158, %v2159
        %v2161 = vsel %vm2087, %v1609, 0.0
        %v2162 = vadd.f32 %v2160, %v2161
        %v2163 = vsel %vm2087, %v1610, 0.0
        %v2164 = vadd.f32 %v2162, %v2163
        %v2165 = vsel %vm2087, %v1611, 0.0
        %v2166 = vadd.f32 %v2164, %v2165
        %v2167 = vsel %vm2087, %v1612, 0.0
        %v2168 = vadd.f32 %v2166, %v2167
        %v2169 = vsel %vm2087, %v1613, 0.0
        %v2170 = vadd.f32 %v2168, %v2169
        %v2171 = vsel %vm2087, %v1614, 0.0
        %v2172 = vadd.f32 %v2170, %v2171
        %v2173 = vsel %vm2087, %v1615, 0.0
        %v2174 = vadd.f32 %v2172, %v2173
        %v2175 = vsel %vm2087, %v1616, 0.0
        %v2176 = vadd.f32 %v2174, %v2175
        %v2177 = vsel %vm2087, %v1617, 0.0
        %v2178 = vadd.f32 %v2176, %v2177
        %v2179 = vsel %vm2087, %v1618, 0.0
        %v2180 = vadd.f32 %v2178, %v2179
        %v2181 = vsel %vm2087, %v1619, 0.0
        %v2182 = vadd.f32 %v2180, %v2181
        %v2183 = vsel %vm2087, %v1620, 0.0
        %v2184 = vadd.f32 %v2182, %v2183
        %v2185 = vsel %vm2087, %v1621, 0.0
        %v2186 = vadd.f32 %v2184, %v2185
        %v2187 = vsel %vm2087, %v1622, 0.0
        %v2188 = vadd.f32 %v2186, %v2187
        %v2189 = vsel %vm2087, %v1623, 0.0
        %v2190 = vadd.f32 %v2188, %v2189
        %v2191 = vsel %vm2087, %v1624, 0.0
        %v2192 = vadd.f32 %v2190, %v2191
        %v2193 = vsel %vm2087, %v1625, 0.0
        %v2194 = vadd.f32 %v2192, %v2193
        %v2195 = vsel %vm2087, %v1626, 0.0
        %v2196 = vadd.f32 %v2194, %v2195
        %v2197 = vsel %vm2087, %v1627, 0.0
        %v2198 = vadd.f32 %v2196, %v2197
        %v2199 = vsel %vm2087, %v1628, 0.0
        %v2200 = vadd.f32 %v2198, %v2199
        %v2201 = vsel %vm2087, %v1629, 0.0
        %v2202 = vadd.f32 %v2200, %v2201
        %v2203 = vsel %vm2087, %v1630, 0.0
        %v2204 = vadd.f32 %v2202, %v2203
        %v2205 = vsel %vm2087, %v1631, 0.0
        %v2206 = vadd.f32 %v2204, %v2205
        %v2207 = vsel %vm2087, %v1632, 0.0
        %v2208 = vadd.f32 %v2206, %v2207
        %v2209 = vsel %vm2087, %v1633, 0.0
        %v2210 = vadd.f32 %v2208, %v2209
        %v2211 = vsel %vm2087, %v1634, 0.0
        %v2212 = vadd.f32 %v2210, %v2211
        %v2213 = vsel %vm2087, %v1635, 0.0
        %v2214 = vadd.f32 %v2212, %v2213
        %v2215 = vsel %vm2087, %v1636, 0.0
        %v2216 = vadd.f32 %v2214, %v2215
        %v2217 = vsel %vm2087, %v1637, 0.0
        %v2218 = vadd.f32 %v2216, %v2217
        %v2219 = vsel %vm2087, %v1638, 0.0
        %v2220 = vadd.f32 %v2218, %v2219
        %v2221 = vsel %vm2087, %v1639, 0.0
        %v2222 = vadd.f32 %v2220, %v2221
        %v2223 = vsel %vm2087, %v1640, 0.0
        %v2224 = vadd.f32 %v2222, %v2223
        %v2225 = vsel %vm2087, %v1641, 0.0
        %v2226 = vadd.f32 %v2224, %v2225
        %v2227 = vsel %vm2087, %v1642, 0.0
        %v2228 = vadd.f32 %v2226, %v2227
        %v2229 = vsel %vm2087, %v1643, 0.0
        %v2230 = vadd.f32 %v2228, %v2229
        %v2231 = vsel %vm2087, %v1644, 0.0
        %v2232 = vadd.f32 %v2230, %v2231
        %v2233 = vsel %vm2087, %v1645, 0.0
        %v2234 = vadd.f32 %v2232, %v2233
        %v2235 = vsel %vm2087, %v1646, 0.0
        %v2236 = vadd.f32 %v2234, %v2235
        %v2237 = vsel %vm2087, %v1647, 0.0
        %v2238 = vadd.f32 %v2236, %v2237
        %v2239 = vsel %vm2087, %v1648, 0.0
        %v2240 = vadd.f32 %v2238, %v2239
        %v2241 = vsel %vm2087, %v1649, 0.0
        %v2242 = vadd.f32 %v2240, %v2241
        %v2243 = vsel %vm2087, %v1650, 0.0
        %v2244 = vadd.f32 %v2242, %v2243
        %v2245 = vsel %vm2087, %v1651, 0.0
        %v2246 = vadd.f32 %v2244, %v2245
        %v2247 = vsel %vm2087, %v1652, 0.0
        %v2248 = vadd.f32 %v2246, %v2247
        %v2249 = vsel %vm2087, %v1653, 0.0
        %v2250 = vadd.f32 %v2248, %v2249
        %v2251 = vsel %vm2087, %v1654, 0.0
        %v2252 = vadd.f32 %v2250, %v2251
        %v2253 = vsel %vm2087, %v1655, 0.0
        %v2254 = vadd.f32 %v2252, %v2253
        %v2255 = vsel %vm2087, %v1656, 0.0
        %v2256 = vadd.f32 %v2254, %v2255
        %v2257 = vsel %vm2087, %v1657, 0.0
        %v2258 = vadd.f32 %v2256, %v2257
        %v2259 = vsel %vm2087, %v1658, 0.0
        %v2260 = vadd.f32 %v2258, %v2259
        %v2261 = vsel %vm2087, %v1659, 0.0
        %v2262 = vadd.f32 %v2260, %v2261
        %v2263 = vsel %vm2087, %v1660, 0.0
        %v2264 = vadd.f32 %v2262, %v2263
        %v2265 = vsel %vm2087, %v1661, 0.0
        %v2266 = vadd.f32 %v2264, %v2265
        %v2267 = vsel %vm2087, %v1662, 0.0
        %v2268 = vadd.f32 %v2266, %v2267
        %v2269 = vsel %vm2087, %v1663, 0.0
        %v2270 = vadd.f32 %v2268, %v2269
        %v2271 = vsel %vm2087, %v1664, 0.0
        %v2272 = vadd.f32 %v2270, %v2271
        %v2273 = vsel %vm2087, %v1665, 0.0
        %v2274 = vadd.f32 %v2272, %v2273
        %v2275 = vsel %vm2087, %v1666, 0.0
        %v2276 = vadd.f32 %v2274, %v2275
        %v2277 = vsel %vm2087, %v1667, 0.0
        %v2278 = vadd.f32 %v2276, %v2277
        %v2279 = vsel %vm2087, %v1668, 0.0
        %v2280 = vadd.f32 %v2278, %v2279
        %v2281 = vsel %vm2087, %v1669, 0.0
        %v2282 = vadd.f32 %v2280, %v2281
        %v2283 = vsel %vm2087, %v1670, 0.0
        %v2284 = vadd.f32 %v2282, %v2283
        %v2285 = vsel %vm2087, %v1671, 0.0
        %v2286 = vadd.f32 %v2284, %v2285
        %v2287 = vsel %vm2087, %v1672, 0.0
        %v2288 = vadd.f32 %v2286, %v2287
        %v2289 = vsel %vm2087, %v1673, 0.0
        %v2290 = vadd.f32 %v2288, %v2289
        %v2291 = vsel %vm2087, %v1674, 0.0
        %v2292 = vadd.f32 %v2290, %v2291
        %v2293 = vsel %vm2087, %v1675, 0.0
        %v2294 = vadd.f32 %v2292, %v2293
        %v2295 = vsel %vm2087, %v1676, 0.0
        %v2296 = vadd.f32 %v2294, %v2295
        %v2297 = vsel %vm2087, %v1677, 0.0
        %v2298 = vadd.f32 %v2296, %v2297
        %v2299 = vsel %vm2087, %v1678, 0.0
        %v2300 = vadd.f32 %v2298, %v2299
        %v2301 = vsel %vm2087, %v1679, 0.0
        %v2302 = vadd.f32 %v2300, %v2301
        %v2303 = vsel %vm2087, %v1680, 0.0
        %v2304 = vadd.f32 %v2302, %v2303
        %v2305 = vsel %vm2087, %v1681, 0.0
        %v2306 = vadd.f32 %v2304, %v2305
        %v2307 = vsel %vm2087, %v1682, 0.0
        %v2308 = vadd.f32 %v2306, %v2307
        %v2309 = vsel %vm2087, %v1683, 0.0
        %v2310 = vadd.f32 %v2308, %v2309
        %v2311 = vsel %vm2087, %v1684, 0.0
        %v2312 = vadd.f32 %v2310, %v2311
        %v2313 = vsel %vm2087, %v1685, 0.0
        %v2314 = vadd.f32 %v2312, %v2313
        %v2315 = vsel %vm2087, %v1686, 0.0
        %v2316 = vadd.f32 %v2314, %v2315
        %v2317 = vsel %vm2087, %v1687, 0.0
        %v2318 = vadd.f32 %v2316, %v2317
        %v2319 = vsel %vm2087, %v1688, 0.0
        %v2320 = vadd.f32 %v2318, %v2319
        %v2321 = vsel %vm2087, %v1689, 0.0
        %v2322 = vadd.f32 %v2320, %v2321
        %v2323 = vsel %vm2087, %v1690, 0.0
        %v2324 = vadd.f32 %v2322, %v2323
        %v2325 = vsel %vm2087, %v1691, 0.0
        %v2326 = vadd.f32 %v2324, %v2325
        %v2327 = vsel %vm2087, %v1692, 0.0
        %v2328 = vadd.f32 %v2326, %v2327
        %v2329 = vsel %vm2087, %v1693, 0.0
        %v2330 = vadd.f32 %v2328, %v2329
        %v2331 = vsel %vm2087, %v1694, 0.0
        %v2332 = vadd.f32 %v2330, %v2331
        %v2333 = vsel %vm2087, %v1695, 0.0
        %v2334 = vadd.f32 %v2332, %v2333
        %v2335 = vsel %vm2087, %v1696, 0.0
        %v2336 = vadd.f32 %v2334, %v2335
        %v2337 = vsel %vm2087, %v1697, 0.0
        %v2338 = vadd.f32 %v2336, %v2337
        %v2339 = vsel %vm2087, %v1698, 0.0
        %v2340 = vadd.f32 %v2338, %v2339
        %v2341 = vsel %vm2087, %v1699, 0.0
        %v2342 = vadd.f32 %v2340, %v2341
        %v2343 = vsel %vm2087, %v1700, 0.0
        %v2344 = vadd.f32 %v2342, %v2343
        %v2345 = vsel %vm2087, %v1701, 0.0
        %v2346 = vadd.f32 %v2344, %v2345
        %v2347 = vsel %vm2087, %v1702, 0.0
        %v2348 = vadd.f32 %v2346, %v2347
        %v2349 = vsel %vm2087, %v1703, 0.0
        %v2350 = vadd.f32 %v2348, %v2349
        %v2351 = vsel %vm2087, %v1704, 0.0
        %v2352 = vadd.f32 %v2350, %v2351
        %v2353 = vsel %vm2087, %v1705, 0.0
        %v2354 = vadd.f32 %v2352, %v2353
        %v2355 = vsel %vm2087, %v1706, 0.0
        %v2356 = vadd.f32 %v2354, %v2355
        %v2357 = vsel %vm2087, %v1707, 0.0
        %v2358 = vadd.f32 %v2356, %v2357
        %v2359 = vsel %vm2087, %v1708, 0.0
        %v2360 = vadd.f32 %v2358, %v2359
        %v2361 = vsel %vm2087, %v1709, 0.0
        %v2362 = vadd.f32 %v2360, %v2361
        %v2363 = vsel %vm2087, %v1710, 0.0
        %v2364 = vadd.f32 %v2362, %v2363
        %v2365 = vsel %vm2087, %v1711, 0.0
        %v2366 = vadd.f32 %v2364, %v2365
        %v2367 = vsel %vm2087, %v1712, 0.0
        %v2368 = vadd.f32 %v2366, %v2367
        %v2369 = vsel %vm2087, %v1713, 0.0
        %v2370 = vadd.f32 %v2368, %v2369
        %v2371 = vsel %vm2087, %v1714, 0.0
        %v2372 = vadd.f32 %v2370, %v2371
        %v2373 = vsel %vm2087, %v1715, 0.0
        %v2374 = vadd.f32 %v2372, %v2373
        %v2375 = vsel %vm2087, %v1716, 0.0
        %v2376 = vadd.f32 %v2374, %v2375
        %v2377 = vsel %vm2087, %v1717, 0.0
        %v2378 = vadd.f32 %v2376, %v2377
        %v2379 = vsel %vm2087, %v1718, 0.0
        %v2380 = vadd.f32 %v2378, %v2379
        %v2381 = vsel %vm2087, %v1719, 0.0
        %v2382 = vadd.f32 %v2380, %v2381
        %v2383 = vsel %vm2087, %v1720, 0.0
        %v2384 = vadd.f32 %v2382, %v2383
        %v2385 = vsel %vm2087, %v1721, 0.0
        %v2386 = vadd.f32 %v2384, %v2385
        %v2387 = vsel %vm2087, %v1722, 0.0
        %v2388 = vadd.f32 %v2386, %v2387
        %v2389 = vsel %vm2087, %v1723, 0.0
        %v2390 = vadd.f32 %v2388, %v2389
        %v2391 = vsel %vm2087, %v1724, 0.0
        %v2392 = vadd.f32 %v2390, %v2391
        %v2393 = vsel %vm2087, %v1725, 0.0
        %v2394 = vadd.f32 %v2392, %v2393
        %v2395 = vsel %vm2087, %v1726, 0.0
        %v2396 = vadd.f32 %v2394, %v2395
        %v2397 = vsel %vm2087, %v1727, 0.0
        %v2398 = vadd.f32 %v2396, %v2397
        %v2399 = vsel %vm2087, %v1728, 0.0
        %v2400 = vadd.f32 %v2398, %v2399
        %v2401 = vsel %vm2087, %v1729, 0.0
        %v2402 = vadd.f32 %v2400, %v2401
        %v2403 = vsel %vm2087, %v1730, 0.0
        %v2404 = vadd.f32 %v2402, %v2403
        %v2405 = vsel %vm2087, %v1731, 0.0
        %v2406 = vadd.f32 %v2404, %v2405
        %v2407 = vsel %vm2087, %v1732, 0.0
        %v2408 = vadd.f32 %v2406, %v2407
        %v2409 = vsel %vm2087, %v1733, 0.0
        %v2410 = vadd.f32 %v2408, %v2409
        %v2411 = vsel %vm2087, %v1734, 0.0
        %v2412 = vadd.f32 %v2410, %v2411
        %v2413 = vsel %vm2087, %v1735, 0.0
        %v2414 = vadd.f32 %v2412, %v2413
        %v2415 = vsel %vm2087, %v1736, 0.0
        %v2416 = vadd.f32 %v2414, %v2415
        %v2417 = vsel %vm2087, %v1737, 0.0
        %v2418 = vadd.f32 %v2416, %v2417
        %v2419 = vsel %vm2087, %v1738, 0.0
        %v2420 = vadd.f32 %v2418, %v2419
        %v2421 = vsel %vm2087, %v1739, 0.0
        %v2422 = vadd.f32 %v2420, %v2421
        %v2423 = vsel %vm2087, %v1740, 0.0
        %v2424 = vadd.f32 %v2422, %v2423
        %v2425 = vsel %vm2087, %v1741, 0.0
        %v2426 = vadd.f32 %v2424, %v2425
        %v2427 = vsel %vm2087, %v1742, 0.0
        %v2428 = vadd.f32 %v2426, %v2427
        %v2429 = vsel %vm2087, %v1743, 0.0
        %v2430 = vadd.f32 %v2428, %v2429
        %v2431 = vsel %vm2087, %v1744, 0.0
        %v2432 = vadd.f32 %v2430, %v2431
        %v2433 = vsel %vm2087, %v1745, 0.0
        %v2434 = vadd.f32 %v2432, %v2433
        %v2435 = vsel %vm2087, %v1746, 0.0
        %v2436 = vadd.f32 %v2434, %v2435
        %v2437 = vsel %vm2087, %v1747, 0.0
        %v2438 = vadd.f32 %v2436, %v2437
        %v2439 = vsel %vm2087, %v1748, 0.0
        %v2440 = vadd.f32 %v2438, %v2439
        %v2441 = vsel %vm2087, %v1749, 0.0
        %v2442 = vadd.f32 %v2440, %v2441
        %v2443 = vsel %vm2087, %v1750, 0.0
        %v2444 = vadd.f32 %v2442, %v2443
        %v2445 = vsel %vm2087, %v1751, 0.0
        %v2446 = vadd.f32 %v2444, %v2445
        %v2447 = vsel %vm2087, %v1752, 0.0
        %v2448 = vadd.f32 %v2446, %v2447
        %v2449 = vsel %vm2087, %v1753, 0.0
        %v2450 = vadd.f32 %v2448, %v2449
        %v2451 = vsel %vm2087, %v1754, 0.0
        %v2452 = vadd.f32 %v2450, %v2451
        %v2453 = vsel %vm2087, %v1755, 0.0
        %v2454 = vadd.f32 %v2452, %v2453
        %v2455 = vsel %vm2087, %v1756, 0.0
        %v2456 = vadd.f32 %v2454, %v2455
        %v2457 = vsel %vm2087, %v1757, 0.0
        %v2458 = vadd.f32 %v2456, %v2457
        %v2459 = vsel %vm2087, %v1758, 0.0
        %v2460 = vadd.f32 %v2458, %v2459
        %v2461 = vsel %vm2087, %v1759, 0.0
        %v2462 = vadd.f32 %v2460, %v2461
        %v2463 = vsel %vm2087, %v1760, 0.0
        %v2464 = vadd.f32 %v2462, %v2463
        %v2465 = vsel %vm2087, %v1761, 0.0
        %v2466 = vadd.f32 %v2464, %v2465
        %v2467 = vsel %vm2087, %v1762, 0.0
        %v2468 = vadd.f32 %v2466, %v2467
        %v2469 = vsel %vm2087, %v1763, 0.0
        %v2470 = vadd.f32 %v2468, %v2469
        %v2471 = vsel %vm2087, %v1764, 0.0
        %v2472 = vadd.f32 %v2470, %v2471
        %v2473 = vsel %vm2087, %v1765, 0.0
        %v2474 = vadd.f32 %v2472, %v2473
        %v2475 = vsel %vm2087, %v1766, 0.0
        %v2476 = vadd.f32 %v2474, %v2475
        %v2477 = vsel %vm2087, %v1767, 0.0
        %v2478 = vadd.f32 %v2476, %v2477
        %v2479 = vsel %vm2087, %v1768, 0.0
        %v2480 = vadd.f32 %v2478, %v2479
        %v2481 = vsel %vm2087, %v1769, 0.0
        %v2482 = vadd.f32 %v2480, %v2481
        %v2483 = vsel %vm2087, %v1770, 0.0
        %v2484 = vadd.f32 %v2482, %v2483
        %v2485 = vsel %vm2087, %v1771, 0.0
        %v2486 = vadd.f32 %v2484, %v2485
        %v2487 = vsel %vm2087, %v1772, 0.0
        %v2488 = vadd.f32 %v2486, %v2487
        %v2489 = vsel %vm2087, %v1773, 0.0
        %v2490 = vadd.f32 %v2488, %v2489
        %v2491 = vsel %vm2087, %v1774, 0.0
        %v2492 = vadd.f32 %v2490, %v2491
        %v2493 = vsel %vm2087, %v1775, 0.0
        %v2494 = vadd.f32 %v2492, %v2493
        %v2495 = vsel %vm2087, %v1776, 0.0
        %v2496 = vadd.f32 %v2494, %v2495
        %v2497 = vsel %vm2087, %v1777, 0.0
        %v2498 = vadd.f32 %v2496, %v2497
        %v2499 = vsel %vm2087, %v1778, 0.0
        %v2500 = vadd.f32 %v2498, %v2499
        %v2501 = vsel %vm2087, %v1779, 0.0
        %v2502 = vadd.f32 %v2500, %v2501
        %v2503 = vsel %vm2087, %v1780, 0.0
        %v2504 = vadd.f32 %v2502, %v2503
        %v2505 = vsel %vm2087, %v1781, 0.0
        %v2506 = vadd.f32 %v2504, %v2505
        %v2507 = vsel %vm2087, %v1782, 0.0
        %v2508 = vadd.f32 %v2506, %v2507
        %v2509 = vsel %vm2087, %v1783, 0.0
        %v2510 = vadd.f32 %v2508, %v2509
        %v2511 = vsel %vm2087, %v1784, 0.0
        %v2512 = vadd.f32 %v2510, %v2511
        %v2513 = vsel %vm2087, %v1785, 0.0
        %v2514 = vadd.f32 %v2512, %v2513
        %v2515 = vsel %vm2087, %v1786, 0.0
        %v2516 = vadd.f32 %v2514, %v2515
        %v2517 = vsel %vm2087, %v1787, 0.0
        %v2518 = vadd.f32 %v2516, %v2517
        %v2519 = vsel %vm2087, %v1788, 0.0
        %v2520 = vadd.f32 %v2518, %v2519
        %v2521 = vsel %vm2087, %v1789, 0.0
        %v2522 = vadd.f32 %v2520, %v2521
        %v2523 = vsel %vm2087, %v1790, 0.0
        %v2524 = vadd.f32 %v2522, %v2523
        %v2525 = vsel %vm2087, %v1791, 0.0
        %v2526 = vadd.f32 %v2524, %v2525
        %v2527 = vsel %vm2087, %v1792, 0.0
        %v2528 = vadd.f32 %v2526, %v2527
        %v2529 = vsel %vm2087, %v1793, 0.0
        %v2530 = vadd.f32 %v2528, %v2529
        %v2531 = vsel %vm2087, %v1794, 0.0
        %v2532 = vadd.f32 %v2530, %v2531
        %v2533 = vsel %vm2087, %v1795, 0.0
        %v2534 = vadd.f32 %v2532, %v2533
        %v2535 = vsel %vm2087, %v1796, 0.0
        %v2536 = vadd.f32 %v2534, %v2535
        %v2537 = vsel %vm2087, %v1797, 0.0
        %v2538 = vadd.f32 %v2536, %v2537
        %v2539 = vsel %vm2087, %v1798, 0.0
        %v2540 = vadd.f32 %v2538, %v2539
        %v2541 = vsel %vm2087, %v1799, 0.0
        %v2542 = vadd.f32 %v2540, %v2541
        %v2543 = vsel %vm2087, %v1800, 0.0
        %v2544 = vadd.f32 %v2542, %v2543
        %v2545 = vsel %vm2087, %v1801, 0.0
        %v2546 = vadd.f32 %v2544, %v2545
        %v2547 = vsel %vm2087, %v1802, 0.0
        %v2548 = vadd.f32 %v2546, %v2547
        %v2549 = vsel %vm2087, %v1803, 0.0
        %v2550 = vadd.f32 %v2548, %v2549
        %v2551 = vsel %vm2087, %v1804, 0.0
        %v2552 = vadd.f32 %v2550, %v2551
        %v2553 = vsel %vm2087, %v1805, 0.0
        %v2554 = vadd.f32 %v2552, %v2553
        %v2555 = vsel %vm2087, %v1806, 0.0
        %v2556 = vadd.f32 %v2554, %v2555
        %v2557 = vsel %vm2087, %v1807, 0.0
        %v2558 = vadd.f32 %v2556, %v2557
        %v2559 = vsel %vm2087, %v1808, 0.0
        %v2560 = vadd.f32 %v2558, %v2559
        %v2561 = vsel %vm2087, %v1809, 0.0
        %v2562 = vadd.f32 %v2560, %v2561
        %v2563 = vsel %vm2087, %v1810, 0.0
        %v2564 = vadd.f32 %v2562, %v2563
        %v2565 = vsel %vm2087, %v1811, 0.0
        %v2566 = vadd.f32 %v2564, %v2565
        %v2567 = vsel %vm2087, %v1812, 0.0
        %v2568 = vadd.f32 %v2566, %v2567
        %v2569 = vsel %vm2087, %v1813, 0.0
        %v2570 = vadd.f32 %v2568, %v2569
        %v2571 = vsel %vm2087, %v1814, 0.0
        %v2572 = vadd.f32 %v2570, %v2571
        %v2573 = vsel %vm2087, %v1815, 0.0
        %v2574 = vadd.f32 %v2572, %v2573
        %v2575 = vsel %vm2087, %v1816, 0.0
        %v2576 = vadd.f32 %v2574, %v2575
        %v2577 = vsel %vm2087, %v1817, 0.0
        %v2578 = vadd.f32 %v2576, %v2577
        %v2579 = vsel %vm2087, %v1818, 0.0
        %v2580 = vadd.f32 %v2578, %v2579
        %v2581 = vsel %vm2087, %v1819, 0.0
        %v2582 = vadd.f32 %v2580, %v2581
        %v2583 = vsel %vm2087, %v1820, 0.0
        %v2584 = vadd.f32 %v2582, %v2583
        %v2585 = vsel %vm2087, %v1821, 0.0
        %v2586 = vadd.f32 %v2584, %v2585
        %v2587 = vsel %vm2087, %v1822, 0.0
        %v2588 = vadd.f32 %v2586, %v2587
        %v2589 = vsel %vm2087, %v1823, 0.0
        %v2590 = vadd.f32 %v2588, %v2589
        %v2591 = vsel %vm2087, %v1824, 0.0
        %v2592 = vadd.f32 %v2590, %v2591
        %v2593 = vsel %vm2087, %v1825, 0.0
        %v2594 = vadd.f32 %v2592, %v2593
        %v2595 = vsel %vm2087, %v1826, 0.0
        %v2596 = vadd.f32 %v2594, %v2595
        %v2597 = vsel %vm2087, %v1827, 0.0
        %v2598 = vadd.f32 %v2596, %v2597
        %2599 = vadd.xlane.f32.xlu0 %v2598
        %v2600 = vpop.xlane.xlu0 %2599
        %v2601 = vadd.f32 %v1828, %v2086
        %v2602 = vadd.f32 %v1829, %v2600
        %vm2603 = vcmask 7168
        %2604 = vst.msk [vmem:[#allocation2] sm:$0xff] %vm2603, %v2601
        %vm2605 = vcmask 1024
        %2606 = vst.msk [vmem:[#allocation2 + $0x8] sm:$0x3] %vm2605, %v2602
        %p2607 = scmp.eq.s32.totalorder %s21, 2
        // Predicated region
        $region37: #{yinkang_forward.1} parent=27 // pred_check
          %p2608 = pneg %p2607
        $region38: #{yinkang_forward.1} parent=27 // pred_check_branch
          %2610 = sbr.rel (%p2608) target = $region40
        $region39: #{yinkang_forward.1} parent=27 // pred_region
          %v2611 = vld [vmem:[#allocation2] sm:$0xff]
          %v2612 = vld [vmem:[#allocation2 + $0x8] sm:$0x3]
          %2613 = vst.msk [vmem:[%s219] sm:$0xff] %vm2603, %v2611
          %2614 = vst.msk [vmem:[%s219 + $0x8] sm:$0x3] %vm2605, %v2612
        $region40: #{yinkang_forward.1} parent=27 // pred_fallthru
          _
        %p2615 = scmp.lt.s32.totalorder %s20, 1
        %s2616 = scalar_select %p2615, %s20, 1
        %s2617 = smul.addr %s2616, 2
        %s2618 = smul.addr %s2617, 8
        %s2619 = scalar_lea.vmem %s2, %s2618
        // Predicated region
        $region41: #{yinkang_forward.1} parent=27 // pred_check
          %p2620 = pneg %p106
        $region42: #{yinkang_forward.1} parent=27 // pred_check_branch
          %2622 = sbr.rel (%p2620) target = $region44
        $region43: #{yinkang_forward.1} parent=27 // pred_region
          _
        $region44: #{yinkang_forward.1} parent=27 // pred_fallthru
          _
      $region28: #{yinkang_forward.1} parent=5 // pred_fallthru
        _
      %p2623 = scmp.le.s32.totalorder 2, %s11
      // Predicated region
      $region45: #{yinkang_forward.1} parent=5 // pred_check
        %p2624 = pneg %p2623
      $region46: #{yinkang_forward.1} parent=5 // pred_check_branch
        %2626 = sbr.rel (%p2624) target = $region48
      $region47: #{yinkang_forward.1} parent=5 // pred_region
        %s2627 = ssub.s32 %s11, 2
        // Predicated region
        $region49: #{yinkang_forward.1} parent=47 // pred_check
          %p2628 = pneg %p112
        $region50: #{yinkang_forward.1} parent=47 // pred_check_branch
          %2630 = sbr.rel (%p2628) target = $region52
        $region51: #{yinkang_forward.1} parent=47 // pred_region
          %p2631 = scmp.lt.s32.totalorder %s22, 1
          %s2632 = scalar_select %p2631, %s22, 1
          %s2633 = smul.addr %s2632, 2
          %s2634 = smul.addr %s2633, 8
          %s2635 = scalar_lea.vmem %s2, %s2634
        $region52: #{yinkang_forward.1} parent=47 // pred_fallthru
          _
      $region48: #{yinkang_forward.1} parent=5 // pred_fallthru
        _
    $region6: #{yinkang_forward.1} parent=1 // loop_footer
      %s15 = sadd.s32 1, %s11
    $region7: #{yinkang_forward.1} parent=1 // loop_footer_branch
      %10 = sbr.rel target = $region3
    $region8: #{yinkang_forward.1} parent=1 // loop_exit
      _
    %2636 = vsyncpa [#allocation4], 1
    %s2637 = scalar_lea.sflag [#allocation4], 1
    %2638 = vsyncpa %s2637, 1

</llo_original>
